<compile_context>
chip_gen: v7x
topology: tpu7x:2x2x1
jax: 0.10.0
libtpu: 0.0.40
codegen_flags: <defaults>
</compile_context>

<pallas_src>
import functools

import jax
import jax.numpy as jnp
from jax import lax
from jax.experimental import pallas as pl
from jax.experimental.pallas import tpu as pltpu

NEG = -1e30    # large-negative padding value (finite: no inf-inf NaNs)
TINY = 1e-30   # log() guard for fully-forbidden columns


# --------------------------------------------------------------------------
# Fused LinearEncoder + LinearCRF kernel (one batch tile per grid step)
# --------------------------------------------------------------------------
def _crf_fused_kernel(tilemax_smem,                   # scalar prefetch (SMEM): (n_tiles,)
                      wr_ref,                         # (S, TB, D)  f32
                      lens_ref,                       # (TB, 1)     i32
                      w_ref,                          # (D, Lp)     bf16
                      b_ref,                          # (1, Lp)     f32
                      trans_ref, trans_end_ref,       # (Lp, Lp), (1, Lp) f32
                      tags_ref,                       # (S, TB, 1)  i32
                      out_ref,                        # (TB, 128) f32: lane0 logZ, lane1 emit_gold, lane2 best
                      tl_ref,                         # (TB, Spad) i32: viterbi labels in absolute time
                      emis_ref, bp_ref,               # VMEM scratch: (S,TB,Lp) f32 / i32
                      *, start_idx, tb, lp, spad):
    S = wr_ref.shape[0]
    D = wr_ref.shape[2]
    TB, Lp = tb, lp
    f32, i32 = jnp.float32, jnp.int32
    pid = pl.program_id(0)

    # ---- fused LinearEncoder: emissions = word_rep @ W + b (bf16 MXU, f32 acc) ----
    x = wr_ref[...].reshape(S * TB, D).astype(jnp.bfloat16)
    emis = jnp.dot(x, w_ref[...], preferred_element_type=f32) + b_ref[...]
    emis3 = emis.reshape(S, TB, Lp)
    emis_ref[...] = emis3

    # ---- per-row lengths (vector block) + tile max length (SMEM scalar) ----
    lens_vec = lens_ref[...]                                     # (TB, 1) i32
    maxlen = tilemax_smem[pid]
    t_hi = jnp.minimum(jnp.maximum(maxlen, 1), S)

    # ---- hoisted loop-invariant constants ----
    trans_v = trans_ref[...]                                     # (Lp, Lp)
    trans_b = trans_v.reshape(1, Lp, Lp)
    trans_end = trans_end_ref[...]                               # (1, Lp)
    cmax = jnp.max(trans_v, axis=0, keepdims=True)               # (1, Lp)
    expT = jnp.exp(trans_v - cmax)                               # (Lp, Lp): padded -> 0, always <= 1
    prev_iota = lax.broadcasted_iota(i32, (1, Lp, 1), 1)
    lane_iota = lax.broadcasted_iota(i32, (TB, Lp), 1)
    col_iota = lax.broadcasted_iota(i32, (TB, spad), 1)

    # ---- gold emission term: one vectorized masked reduce (outside the recursion) ----
    lane3 = lax.broadcasted_iota(i32, (S, TB, Lp), 2)
    t3 = lax.broadcasted_iota(i32, (S, TB, 1), 0)
    gold_mask = (lane3 == tags_ref[...]) & (t3 < lens_vec[None])
    emit_gold = jnp.sum(jnp.sum(jnp.where(gold_mask, emis3, 0.0),
                                axis=2, keepdims=True), axis=0)   # (TB, 1)

    # ---- backpointer identity init (covers t >= len and t >= t_hi) ----
    bp_ref[...] = jnp.broadcast_to(lane_iota[None], (S, TB, Lp))

    # ---- t = 0 init (forward alpha == viterbi v) ----
    emit0 = emis3[0]                                              # (TB, Lp)
    init = trans_v[start_idx:start_idx + 1, :] + emit0            # (TB, Lp)

    # ---- time recursion: logsumexp via MXU matmul + viterbi max, bounded by tile max len ----
    def step(t, carry):
        alpha, v = carry
        emit = emis_ref[t]                                        # (TB, Lp)
        valid = t < lens_vec                                      # (TB, 1)

        # log-partition: exp-space matmul (EUP work is only TB*Lp exp + one log)
        m = jnp.max(alpha, axis=1, keepdims=True)                 # (TB, 1)
        p = jnp.exp(alpha - m)                                    # (TB, Lp)
        s = jnp.dot(p, expT, preferred_element_type=f32)          # (TB, Lp)  MXU
        new_alpha = jnp.log(jnp.maximum(s, TINY)) + m + cmax + emit

        # viterbi recursion (emission added after the max)
        x_v = v[:, :, None] + trans_b                             # (TB, Lp, Lp)
        m_v = jnp.max(x_v, axis=1)                                # (TB, Lp)
        new_v = m_v + emit
        bp = jnp.min(jnp.where(x_v >= m_v[:, None, :], prev_iota, Lp),
                     axis=1).astype(i32)                          # (TB, Lp), first-max tie-break
        bp_ref[t] = jnp.where(valid, bp, lane_iota)               # identity past seq end

        alpha = jnp.where(valid, new_alpha, alpha)
        v = jnp.where(valid, new_v, v)
        return alpha, v

    alpha, v = lax.fori_loop(1, t_hi, step, (init, init))

    # ---- per-row log-partition and best viterbi score ----
    last_alpha = alpha + trans_end
    ma = jnp.max(last_alpha, axis=1, keepdims=True)
    unlabeled = ma + jnp.log(jnp.sum(jnp.exp(last_alpha - ma), axis=1, keepdims=True))

    last_v = v + trans_end
    best = jnp.max(last_v, axis=1, keepdims=True)
    cur0 = jnp.min(jnp.where(last_v >= best, lane_iota, Lp),
                   axis=1, keepdims=True).astype(i32)             # (TB, 1)

    # ---- lane-dense packed scalar outputs ----
    lane_o = lax.broadcasted_iota(i32, (TB, 128), 1)
    out_ref[...] = jnp.where(lane_o == 0, unlabeled,
                   jnp.where(lane_o == 1, emit_gold,
                   jnp.where(lane_o == 2, best, 0.0)))

    # ---- viterbi backtrack: one (TB,Lp) bp slice per step, vectorized over rows ----
    tl0 = jnp.where(col_iota == S - 1, cur0, 0)                   # labels in absolute time

    def back(d, carry):
        cur, tl = carry
        t = S - 1 - d
        bprow = bp_ref[t]                                         # (TB, Lp)
        nxt = jnp.sum(jnp.where(lane_iota == cur, bprow, 0),
                      axis=1, keepdims=True)                      # (TB, 1)
        tl = jnp.where(col_iota == t - 1, nxt, tl)
        return nxt, tl

    _, tl = lax.fori_loop(0, S - 1, back, (cur0, tl0))
    tl_ref[...] = tl


# --------------------------------------------------------------------------
# host wrapper: padding, layout prep, pallas_call, gold transitions, decode map
# --------------------------------------------------------------------------
def _pick_tile(batch):
    b8 = ((batch + 7) // 8) * 8
    tb = min(64, b8)
    if b8 // tb < 2 and b8 >= 16:     # give v7x's two TensorCores >= 2 grid tiles
        tb = max(8, ((b8 // 2) // 8) * 8)
    return tb


def transformers_crf_pallas(word_rep_tm, word_seq_lens, tags, w, b, transition,
                            start_idx, stop_idx, *, tile_b=None):
    # word_rep_tm: (S, B, D) time-major f32 (produced directly by the embedder glue)
    S, B, D = word_rep_tm.shape
    L = transition.shape[0]
    Lp = ((L + 127) // 128) * 128
    Spad = ((S + 127) // 128) * 128
    TB = tile_b if tile_b is not None else _pick_tile(B)
    B_pad = ((B + TB - 1) // TB) * TB
    n_tiles = B_pad // TB
    f32, i32, bf16 = jnp.float32, jnp.int32, jnp.bfloat16

    # pad label dim (padded labels are inert: NEG transitions / NEG emission bias)
    w_p = jnp.zeros((D, Lp), bf16).at[:, :L].set(w.astype(bf16))
    b_p = jnp.full((1, Lp), NEG, f32).at[0, :L].set(b.astype(f32))
    trans_p = jnp.full((Lp, Lp), NEG, f32).at[:L, :L].set(transition.astype(f32))
    trans_end = trans_p[:, stop_idx].reshape(1, Lp)

    # pad batch; time-major word_rep / tags for dynamic-t indexing in the kernel
    wr = jnp.zeros((S, B_pad, D), f32).at[:, :B].set(word_rep_tm.astype(f32))
    tg = jnp.zeros((B_pad, S), i32).at[:B].set(tags.astype(i32))
    tg_sb1 = jnp.transpose(tg, (1, 0))[:, :, None]                # (S, B_pad, 1)
    lens = jnp.ones((B_pad,), i32).at[:B].set(word_seq_lens.astype(i32))
    lens2d = lens[:, None]                                        # (B_pad, 1)
    tile_max = jnp.max(lens.reshape(n_tiles, TB), axis=1).astype(i32)

    kernel = functools.partial(_crf_fused_kernel, start_idx=start_idx,
                               tb=TB, lp=Lp, spad=Spad)
    packed, timelabels = pl.pallas_call(
        kernel,
        out_shape=(
            jax.ShapeDtypeStruct((B_pad, 128), f32),
            jax.ShapeDtypeStruct((B_pad, Spad), i32),
        ),
        grid_spec=pltpu.PrefetchScalarGridSpec(
            num_scalar_prefetch=1,
            grid=(n_tiles,),
            in_specs=[
                pl.BlockSpec((S, TB, D), lambda i, tm: (0, i, 0)),
                pl.BlockSpec((TB, 1), lambda i, tm: (i, 0)),
                pl.BlockSpec((D, Lp), lambda i, tm: (0, 0)),
                pl.BlockSpec((1, Lp), lambda i, tm: (0, 0)),
                pl.BlockSpec((Lp, Lp), lambda i, tm: (0, 0)),
                pl.BlockSpec((1, Lp), lambda i, tm: (0, 0)),
                pl.BlockSpec((S, TB, 1), lambda i, tm: (0, i, 0)),
            ],
            out_specs=(
                pl.BlockSpec((TB, 128), lambda i, tm: (i, 0)),
                pl.BlockSpec((TB, Spad), lambda i, tm: (i, 0)),
            ),
            scratch_shapes=[
                pltpu.VMEM((S, TB, Lp), f32),   # emissions (fused encoder output)
                pltpu.VMEM((S, TB, Lp), i32),   # viterbi backpointers
            ],
        ),
        compiler_params=pltpu.CompilerParams(
            dimension_semantics=("parallel",),
            vmem_limit_bytes=48 * 1024 * 1024,
        ),
    )(tile_max, wr, lens2d, w_p, b_p, trans_p, trans_end, tg_sb1)

    packed = packed[:B]
    unlabeled = packed[:, 0]
    emit_gold = packed[:, 1]
    best = packed[:, 2:3]
    timelabels = timelabels[:B, :S]

    # ---- gold transition/start/end score: no sequential dependency -> XLA gathers ----
    tags_i = tags.astype(i32)
    lens_b = word_seq_lens.astype(i32)
    first = transition[start_idx, tags_i[:, 0]]
    if S > 1:
        pair = transition[tags_i[:, :-1], tags_i[:, 1:]]          # (B, S-1)
        t_idx = jnp.arange(1, S)[None, :]
        pair = jnp.sum(jnp.where(t_idx < lens_b[:, None], pair, 0.0), axis=1)
    else:
        pair = jnp.zeros((B,), f32)
    last_tag = jnp.take_along_axis(tags_i, (lens_b - 1)[:, None], axis=1)[:, 0]
    gold_trans = first + pair + transition[last_tag, stop_idx]

    labeled = emit_gold + gold_trans
    loss = jnp.sum(unlabeled - labeled)

    # ---- map absolute-time labels to the reference's reversed decode order ----
    c = jnp.arange(S)[None, :]
    src = jnp.clip(lens_b[:, None] - 1 - c, 0, S - 1)
    dec = jnp.take_along_axis(timelabels, src, axis=1)
    dec = jnp.where(c < lens_b[:, None], dec, start_idx)          # reference clamps to start_idx
    return loss, best, dec


# --------------------------------------------------------------------------
# Full TransformersCRF.forward
# --------------------------------------------------------------------------
def transformers_crf_forward(params, words, word_seq_lens, orig_to_tok_index,
                             input_mask, labels, start_idx, stop_idx):
    # --- embedder (glue): embedding lookup + subword->word gather ---------------
    # TODO(synk): pretrained transformer replaced by deterministic embedding lookup.
    word_emb = params["emb_table"][words] * input_mask[..., None].astype(jnp.float32)
    word_rep = jnp.take_along_axis(word_emb, orig_to_tok_index[..., None], axis=1)
    # produce word_rep time-major directly (the transpose fuses into the gather copy)
    word_rep_tm = jnp.transpose(word_rep, (1, 0, 2))

    # --- fused encoder + CRF (Pallas kernel) ------------------------------------
    return transformers_crf_pallas(
        word_rep_tm, word_seq_lens, labels, params["w"], params["b"],
        params["transition"], start_idx, stop_idx)


# --------------------------------------------------------------------------
# main
# --------------------------------------------------------------------------
if __name__ == "__main__":
    key = jax.random.PRNGKey(0)
    B, S, T, D, V, L = 2, 8, 10, 32, 64, 12          # label_size includes PAD/START/STOP
    pad_idx, start_idx, stop_idx = 0, L - 2, L - 1

    k1, k2, k3, k4, k5, k6, k7 = jax.random.split(key, 7)

    # parameters (deterministic init)
    emb_table = 0.1 * jax.random.normal(k1, (V, D), jnp.float32)
    w = 0.1 * jax.random.normal(k2, (D, L), jnp.float32)
    b = 0.1 * jax.random.normal(k3, (L,), jnp.float32)
    transition = jax.random.normal(k4, (L, L), jnp.float32)
    transition = transition.at[:, start_idx].set(-10000.0)
    transition = transition.at[stop_idx, :].set(-10000.0)
    transition = transition.at[:, pad_idx].set(-10000.0)
    transition = transition.at[pad_idx, :].set(-10000.0)
    params = dict(emb_table=emb_table, w=w, b=b, transition=transition)

    # inputs
    words = jax.random.randint(k5, (B, T), 0, V, jnp.int32)
    input_mask = jnp.ones((B, T), jnp.int32).at[1, 7:].set(0)
    orig_to_tok_index = jnp.stack(
        [jnp.arange(S, dtype=jnp.int32),
         jnp.minimum(jnp.arange(S, dtype=jnp.int32) + 1, T - 1)], axis=0)
    word_seq_lens = jnp.array([8, 5], jnp.int32)
    labels = jax.random.randint(k6, (B, S), 1, L - 2, jnp.int32)  # real labels only

    loss, best_scores, decode_idx = transformers_crf_forward(
        params, words, word_seq_lens, orig_to_tok_index, input_mask, labels,
        start_idx, stop_idx)

    jax.block_until_ready((loss, best_scores, decode_idx))
    assert loss.shape == ()
    assert best_scores.shape == (B, 1)
    assert decode_idx.shape == (B, S)
    assert bool(jnp.isfinite(loss))
    print("KERNEL_OK")
</pallas_src>

<mosaic_0001>
module attributes {stable_mosaic.version = 11 : i64} {
  func.func @_crf_fused_kernel(%arg0: i32, %arg1: memref<1xi32, #tpu.memory_space<smem>>, %arg2: memref<8x8x32xf32, #tpu.memory_space<vmem>>, %arg3: memref<8x1xi32, #tpu.memory_space<vmem>>, %arg4: memref<32x128xbf16, #tpu.memory_space<vmem>>, %arg5: memref<1x128xf32, #tpu.memory_space<vmem>>, %arg6: memref<128x128xf32, #tpu.memory_space<vmem>>, %arg7: memref<1x128xf32, #tpu.memory_space<vmem>>, %arg8: memref<8x8x1xi32, #tpu.memory_space<vmem>>, %arg9: memref<8x128xf32, #tpu.memory_space<vmem>>, %arg10: memref<8x128xi32, #tpu.memory_space<vmem>>, %arg11: memref<8x8x128xf32, #tpu.memory_space<vmem>>, %arg12: memref<8x8x128xi32, #tpu.memory_space<vmem>>) attributes {dimension_semantics = [#tpu.dimension_semantics<parallel>], iteration_bounds = array<i64: 1>, scalar_prefetch = 1 : i64, scratch_operands = 2 : i64, tpu.core_type = #tpu.core_type<tc>, window_params = [{transform_indices = @transform_0, window_bounds = array<i64: 8, 8, 32>}, {transform_indices = @transform_1, window_bounds = array<i64: 8, 1>}, {pipeline_mode = #tpu.pipeline_mode<synchronous>, transform_indices = @transform_2, window_bounds = array<i64: 32, 128>}, {pipeline_mode = #tpu.pipeline_mode<synchronous>, transform_indices = @transform_3, window_bounds = array<i64: 1, 128>}, {pipeline_mode = #tpu.pipeline_mode<synchronous>, transform_indices = @transform_4, window_bounds = array<i64: 128, 128>}, {pipeline_mode = #tpu.pipeline_mode<synchronous>, transform_indices = @transform_5, window_bounds = array<i64: 1, 128>}, {transform_indices = @transform_6, window_bounds = array<i64: 8, 8, 1>}, {transform_indices = @transform_7, window_bounds = array<i64: 8, 128>}, {transform_indices = @transform_8, window_bounds = array<i64: 8, 128>}]} {
    %c0 = arith.constant 0 : index
    %c0_0 = arith.constant 0 : index
    %c0_1 = arith.constant 0 : index
    %0 = vector.load %arg2[%c0, %c0_0, %c0_1] : memref<8x8x32xf32, #tpu.memory_space<vmem>>, vector<8x8x32xf32>
    %1 = vector.shape_cast %0 : vector<8x8x32xf32> to vector<64x32xf32>
    %2 = arith.truncf %1 : vector<64x32xf32> to vector<64x32xbf16>
    %c0_2 = arith.constant 0 : index
    %c0_3 = arith.constant 0 : index
    %3 = vector.load %arg4[%c0_2, %c0_3] : memref<32x128xbf16, #tpu.memory_space<vmem>>, vector<32x128xbf16>
    %cst = arith.constant dense<0.000000e+00> : vector<64x128xf32>
    %4 = tpu.matmul %2, %3, %cst {dimension_numbers = #tpu.dot_dimension_numbers<[1], [0], [0], [1], [0, 0, 1, 1], [], []>} : vector<64x32xbf16>, vector<32x128xbf16>, vector<64x128xf32> -> vector<64x128xf32>
    %c0_4 = arith.constant 0 : index
    %c0_5 = arith.constant 0 : index
    %5 = vector.load %arg5[%c0_4, %c0_5] : memref<1x128xf32, #tpu.memory_space<vmem>>, vector<1x128xf32>
    %6 = vector.broadcast %5 : vector<1x128xf32> to vector<64x128xf32>
    %7 = arith.addf %4, %6 : vector<64x128xf32>
    %8 = vector.shape_cast %7 : vector<64x128xf32> to vector<8x8x128xf32>
    %c0_6 = arith.constant 0 : index
    %c0_7 = arith.constant 0 : index
    %c0_8 = arith.constant 0 : index
    %9 = vector.load %arg11[%c0_6, %c0_7, %c0_8] : memref<8x8x128xf32, #tpu.memory_space<vmem>>, vector<8x8x128xf32>
    tpu.vector_store %arg11[%c0_6, %c0_7, %c0_8], %8 {strides = array<i32>} : memref<8x8x128xf32, #tpu.memory_space<vmem>>, vector<8x8x128xf32>,
    %c0_9 = arith.constant 0 : index
    %c0_10 = arith.constant 0 : index
    %10 = vector.load %arg3[%c0_9, %c0_10] : memref<8x1xi32, #tpu.memory_space<vmem>>, vector<8x1xi32>
    %11 = arith.index_cast %arg0 : i32 to index
    %12 = memref.load %arg1[%11] : memref<1xi32, #tpu.memory_space<smem>>
    %c1_i32 = arith.constant 1 : i32
    %13 = arith.maxsi %12, %c1_i32 : i32
    %c8_i32 = arith.constant 8 : i32
    %14 = arith.minsi %13, %c8_i32 : i32
    %c0_11 = arith.constant 0 : index
    %c0_12 = arith.constant 0 : index
    %15 = vector.load %arg6[%c0_11, %c0_12] : memref<128x128xf32, #tpu.memory_space<vmem>>, vector<128x128xf32>
    %16 = vector.shape_cast %15 : vector<128x128xf32> to vector<1x128x128xf32>
    %c0_13 = arith.constant 0 : index
    %c0_14 = arith.constant 0 : index
    %17 = vector.load %arg7[%c0_13, %c0_14] : memref<1x128xf32, #tpu.memory_space<vmem>>, vector<1x128xf32>
    %cst_15 = arith.constant dense<0xFF800000> : vector<128xf32>
    %18 = vector.multi_reduction <maximumf>, %15, %cst_15 [0] : vector<128x128xf32> to vector<128xf32>
    %19 = vector.shape_cast %18 : vector<128xf32> to vector<1x128xf32>
    %20 = vector.broadcast %19 : vector<1x128xf32> to vector<128x128xf32>
    %21 = arith.subf %15, %20 : vector<128x128xf32>
    %22 = math.exp %21 : vector<128x128xf32>
    %23 = tpu.iota {dimensions = array<i32: 1>} : vector<1x128x1xi32>
    %24 = tpu.iota {dimensions = array<i32: 1>} : vector<8x128xi32>
    %25 = tpu.iota {dimensions = array<i32: 1>} : vector<8x128xi32>
    %26 = tpu.iota {dimensions = array<i32: 2>} : vector<8x8x128xi32>
    %27 = tpu.iota {dimensions = array<i32: 0>} : vector<8x8x1xi32>
    %c0_16 = arith.constant 0 : index
    %c0_17 = arith.constant 0 : index
    %c0_18 = arith.constant 0 : index
    %28 = vector.load %arg8[%c0_16, %c0_17, %c0_18] : memref<8x8x1xi32, #tpu.memory_space<vmem>>, vector<8x8x1xi32>
    %29 = vector.broadcast %28 : vector<8x8x1xi32> to vector<8x8x128xi32>
    %30 = arith.cmpi eq, %26, %29 : vector<8x8x128xi32>
    %31 = vector.shape_cast %10 : vector<8x1xi32> to vector<1x8x1xi32>
    %32 = vector.broadcast %31 : vector<1x8x1xi32> to vector<8x8x1xi32>
    %33 = arith.cmpi slt, %27, %32 : vector<8x8x1xi32>
    %34 = vector.broadcast %33 : vector<8x8x1xi1> to vector<8x8x128xi1>
    %35 = arith.andi %30, %34 : vector<8x8x128xi1>
    %cst_19 = arith.constant 0.000000e+00 : f32
    %36 = vector.broadcast %cst_19 : f32 to vector<8x8x128xf32>
    %37 = arith.select %35, %8, %36 : vector<8x8x128xi1>, vector<8x8x128xf32>
    %cst_20 = arith.constant dense<0.000000e+00> : vector<8x8xf32>
    %38 = vector.multi_reduction <add>, %37, %cst_20 [2] : vector<8x8x128xf32> to vector<8x8xf32>
    %39 = vector.shape_cast %38 : vector<8x8xf32> to vector<8x8x1xf32>
    %cst_21 = arith.constant dense<0.000000e+00> : vector<8x1xf32>
    %40 = vector.multi_reduction <add>, %39, %cst_21 [0] : vector<8x8x1xf32> to vector<8x1xf32>
    %41 = vector.shape_cast %24 : vector<8x128xi32> to vector<1x8x128xi32>
    %42 = vector.shape_cast %41 : vector<1x8x128xi32> to vector<1x8x128xi32>
    %43 = vector.broadcast %42 : vector<1x8x128xi32> to vector<8x8x128xi32>
    %c0_22 = arith.constant 0 : index
    %c0_23 = arith.constant 0 : index
    %c0_24 = arith.constant 0 : index
    %44 = vector.load %arg12[%c0_22, %c0_23, %c0_24] : memref<8x8x128xi32, #tpu.memory_space<vmem>>, vector<8x8x128xi32>
    tpu.vector_store %arg12[%c0_22, %c0_23, %c0_24], %43 {strides = array<i32>} : memref<8x8x128xi32, #tpu.memory_space<vmem>>, vector<8x8x128xi32>,
    %45 = vector.extract_strided_slice %8 {offsets = [0, 0, 0], sizes = [1, 8, 128], strides = [1, 1, 1]} : vector<8x8x128xf32> to vector<1x8x128xf32>
    %46 = vector.shape_cast %45 : vector<1x8x128xf32> to vector<8x128xf32>
    %47 = vector.extract_strided_slice %15 {offsets = [10, 0], sizes = [1, 128], strides = [1, 1]} : vector<128x128xf32> to vector<1x128xf32>
    %48 = vector.broadcast %47 : vector<1x128xf32> to vector<8x128xf32>
    %49 = arith.addf %48, %46 : vector<8x128xf32>
    %c1_i32_25 = arith.constant 1 : i32
    %50 = arith.subi %14, %c1_i32_25 : i32
    %51 = arith.addi %c1_i32_25, %50 : i32
    %c1_i32_26 = arith.constant 1 : i32
    %52:2 = scf.for %arg13 = %c1_i32_25 to %51 step %c1_i32_26 iter_args(%arg14 = %49, %arg15 = %49) -> (vector<8x128xf32>, vector<8x128xf32>)  : i32 {
      %101 = arith.index_cast %arg13 : i32 to index
      %c0_42 = arith.constant 0 : index
      %c0_43 = arith.constant 0 : index
      %102 = vector.load %arg11[%101, %c0_42, %c0_43] : memref<8x8x128xf32, #tpu.memory_space<vmem>>, vector<1x8x128xf32>
      %103 = vector.shape_cast %102 : vector<1x8x128xf32> to vector<8x128xf32>
      %104 = vector.broadcast %arg13 : i32 to vector<8x1xi32>
      %105 = arith.cmpi slt, %104, %10 : vector<8x1xi32>
      %cst_44 = arith.constant dense<0xFF800000> : vector<8xf32>
      %106 = vector.multi_reduction <maximumf>, %arg14, %cst_44 [1] : vector<8x128xf32> to vector<8xf32>
      %107 = vector.shape_cast %106 : vector<8xf32> to vector<8x1xf32>
      %108 = vector.broadcast %107 : vector<8x1xf32> to vector<8x128xf32>
      %109 = arith.subf %arg14, %108 : vector<8x128xf32>
      %110 = math.exp %109 : vector<8x128xf32>
      %cst_45 = arith.constant dense<0.000000e+00> : vector<8x128xf32>
      %111 = tpu.matmul %110, %22, %cst_45 {dimension_numbers = #tpu.dot_dimension_numbers<[1], [0], [0], [1], [0, 0, 1, 1], [], []>} : vector<8x128xf32>, vector<128x128xf32>, vector<8x128xf32> -> vector<8x128xf32>
      %cst_46 = arith.constant 1.000000e-30 : f32
      %112 = vector.broadcast %cst_46 : f32 to vector<8x128xf32>
      %113 = arith.maximumf %111, %112 : vector<8x128xf32>
      %114 = math.log %113 : vector<8x128xf32>
      %115 = vector.broadcast %107 : vector<8x1xf32> to vector<8x128xf32>
      %116 = arith.addf %114, %115 : vector<8x128xf32>
      %117 = vector.broadcast %19 : vector<1x128xf32> to vector<8x128xf32>
      %118 = arith.addf %116, %117 : vector<8x128xf32>
      %119 = arith.addf %118, %103 : vector<8x128xf32>
      %120 = vector.shape_cast %arg15 : vector<8x128xf32> to vector<8x128x1xf32>
      %121 = vector.broadcast %120 : vector<8x128x1xf32> to vector<8x128x128xf32>
      %122 = vector.broadcast %16 : vector<1x128x128xf32> to vector<8x128x128xf32>
      %123 = arith.addf %121, %122 : vector<8x128x128xf32>
      %cst_47 = arith.constant dense<0xFF800000> : vector<8x128xf32>
      %124 = vector.multi_reduction <maximumf>, %123, %cst_47 [1] : vector<8x128x128xf32> to vector<8x128xf32>
      %125 = arith.addf %124, %103 : vector<8x128xf32>
      %126 = vector.shape_cast %124 : vector<8x128xf32> to vector<8x1x128xf32>
      %127 = vector.broadcast %126 : vector<8x1x128xf32> to vector<8x128x128xf32>
      %128 = arith.cmpf oge, %123, %127 : vector<8x128x128xf32>
      %c128_i32_48 = arith.constant 128 : i32
      %129 = vector.shape_cast %23 : vector<1x128x1xi32> to vector<1x128x1xi32>
      %130 = vector.broadcast %129 : vector<1x128x1xi32> to vector<8x128x128xi32>
      %131 = vector.broadcast %c128_i32_48 : i32 to vector<8x128x128xi32>
      %132 = arith.select %128, %130, %131 : vector<8x128x128xi1>, vector<8x128x128xi32>
      %cst_49 = arith.constant dense<2147483647> : vector<8x128xi32>
      %133 = vector.multi_reduction <minsi>, %132, %cst_49 [1] : vector<8x128x128xi32> to vector<8x128xi32>
      %134 = vector.shape_cast %105 : vector<8x1xi1> to vector<8x1xi1>
      %135 = vector.broadcast %134 : vector<8x1xi1> to vector<8x128xi1>
      %136 = arith.select %135, %133, %24 : vector<8x128xi1>, vector<8x128xi32>
      %137 = arith.index_cast %arg13 : i32 to index
      %c0_50 = arith.constant 0 : index
      %c0_51 = arith.constant 0 : index
      %138 = vector.load %arg12[%137, %c0_50, %c0_51] : memref<8x8x128xi32, #tpu.memory_space<vmem>>, vector<1x8x128xi32>
      %139 = vector.shape_cast %138 : vector<1x8x128xi32> to vector<8x128xi32>
      %140 = vector.shape_cast %136 : vector<8x128xi32> to vector<1x8x128xi32>
      tpu.vector_store %arg12[%137, %c0_50, %c0_51], %140 {strides = array<i32>} : memref<8x8x128xi32, #tpu.memory_space<vmem>>, vector<1x8x128xi32>,
      %141 = vector.shape_cast %105 : vector<8x1xi1> to vector<8x1xi1>
      %142 = vector.broadcast %141 : vector<8x1xi1> to vector<8x128xi1>
      %143 = arith.select %142, %119, %arg14 : vector<8x128xi1>, vector<8x128xf32>
      %144 = vector.shape_cast %105 : vector<8x1xi1> to vector<8x1xi1>
      %145 = vector.broadcast %144 : vector<8x1xi1> to vector<8x128xi1>
      %146 = arith.select %145, %125, %arg15 : vector<8x128xi1>, vector<8x128xf32>
      scf.yield %143, %146 : vector<8x128xf32>, vector<8x128xf32>
    }
    %53 = vector.broadcast %17 : vector<1x128xf32> to vector<8x128xf32>
    %54 = arith.addf %52#0, %53 : vector<8x128xf32>
    %cst_27 = arith.constant dense<0xFF800000> : vector<8xf32>
    %55 = vector.multi_reduction <maximumf>, %54, %cst_27 [1] : vector<8x128xf32> to vector<8xf32>
    %56 = vector.shape_cast %55 : vector<8xf32> to vector<8x1xf32>
    %57 = vector.broadcast %56 : vector<8x1xf32> to vector<8x128xf32>
    %58 = arith.subf %54, %57 : vector<8x128xf32>
    %59 = math.exp %58 : vector<8x128xf32>
    %cst_28 = arith.constant dense<0.000000e+00> : vector<8xf32>
    %60 = vector.multi_reduction <add>, %59, %cst_28 [1] : vector<8x128xf32> to vector<8xf32>
    %61 = vector.shape_cast %60 : vector<8xf32> to vector<8x1xf32>
    %62 = math.log %61 : vector<8x1xf32>
    %63 = arith.addf %56, %62 : vector<8x1xf32>
    %64 = vector.broadcast %17 : vector<1x128xf32> to vector<8x128xf32>
    %65 = arith.addf %52#1, %64 : vector<8x128xf32>
    %cst_29 = arith.constant dense<0xFF800000> : vector<8xf32>
    %66 = vector.multi_reduction <maximumf>, %65, %cst_29 [1] : vector<8x128xf32> to vector<8xf32>
    %67 = vector.shape_cast %66 : vector<8xf32> to vector<8x1xf32>
    %68 = vector.broadcast %67 : vector<8x1xf32> to vector<8x128xf32>
    %69 = arith.cmpf oge, %65, %68 : vector<8x128xf32>
    %c128_i32 = arith.constant 128 : i32
    %70 = vector.broadcast %c128_i32 : i32 to vector<8x128xi32>
    %71 = arith.select %69, %24, %70 : vector<8x128xi1>, vector<8x128xi32>
    %cst_30 = arith.constant dense<2147483647> : vector<8xi32>
    %72 = vector.multi_reduction <minsi>, %71, %cst_30 [1] : vector<8x128xi32> to vector<8xi32>
    %73 = vector.shape_cast %72 : vector<8xi32> to vector<8x1xi32>
    %74 = tpu.iota {dimensions = array<i32: 1>} : vector<8x128xi32>
    %c0_i32 = arith.constant 0 : i32
    %75 = vector.broadcast %c0_i32 : i32 to vector<8x128xi32>
    %76 = arith.cmpi eq, %74, %75 : vector<8x128xi32>
    %c1_i32_31 = arith.constant 1 : i32
    %77 = vector.broadcast %c1_i32_31 : i32 to vector<8x128xi32>
    %78 = arith.cmpi eq, %74, %77 : vector<8x128xi32>
    %c2_i32 = arith.constant 2 : i32
    %79 = vector.broadcast %c2_i32 : i32 to vector<8x128xi32>
    %80 = arith.cmpi eq, %74, %79 : vector<8x128xi32>
    %cst_32 = arith.constant 0.000000e+00 : f32
    %81 = vector.shape_cast %67 : vector<8x1xf32> to vector<8x1xf32>
    %82 = vector.broadcast %81 : vector<8x1xf32> to vector<8x128xf32>
    %83 = vector.broadcast %cst_32 : f32 to vector<8x128xf32>
    %84 = arith.select %80, %82, %83 : vector<8x128xi1>, vector<8x128xf32>
    %85 = vector.shape_cast %40 : vector<8x1xf32> to vector<8x1xf32>
    %86 = vector.broadcast %85 : vector<8x1xf32> to vector<8x128xf32>
    %87 = arith.select %78, %86, %84 : vector<8x128xi1>, vector<8x128xf32>
    %88 = vector.shape_cast %63 : vector<8x1xf32> to vector<8x1xf32>
    %89 = vector.broadcast %88 : vector<8x1xf32> to vector<8x128xf32>
    %90 = arith.select %76, %89, %87 : vector<8x128xi1>, vector<8x128xf32>
    %c0_33 = arith.constant 0 : index
    %c0_34 = arith.constant 0 : index
    %91 = vector.load %arg9[%c0_33, %c0_34] : memref<8x128xf32, #tpu.memory_space<vmem>>, vector<8x128xf32>
    tpu.vector_store %arg9[%c0_33, %c0_34], %90 {strides = array<i32>} : memref<8x128xf32, #tpu.memory_space<vmem>>, vector<8x128xf32>,
    %c7_i32 = arith.constant 7 : i32
    %92 = vector.broadcast %c7_i32 : i32 to vector<8x128xi32>
    %93 = arith.cmpi eq, %25, %92 : vector<8x128xi32>
    %c0_i32_35 = arith.constant 0 : i32
    %94 = vector.shape_cast %73 : vector<8x1xi32> to vector<8x1xi32>
    %95 = vector.broadcast %94 : vector<8x1xi32> to vector<8x128xi32>
    %96 = vector.broadcast %c0_i32_35 : i32 to vector<8x128xi32>
    %97 = arith.select %93, %95, %96 : vector<8x128xi1>, vector<8x128xi32>
    %c0_i32_36 = arith.constant 0 : i32
    %c7_i32_37 = arith.constant 7 : i32
    %98 = arith.addi %c0_i32_36, %c7_i32_37 : i32
    %c1_i32_38 = arith.constant 1 : i32
    %99:2 = scf.for %arg13 = %c0_i32_36 to %98 step %c1_i32_38 iter_args(%arg14 = %73, %arg15 = %97) -> (vector<8x1xi32>, vector<8x128xi32>)  : i32 {
      %c7_i32_42 = arith.constant 7 : i32
      %101 = arith.subi %c7_i32_42, %arg13 : i32
      %102 = arith.index_cast %101 : i32 to index
      %c0_43 = arith.constant 0 : index
      %c0_44 = arith.constant 0 : index
      %103 = vector.load %arg12[%102, %c0_43, %c0_44] : memref<8x8x128xi32, #tpu.memory_space<vmem>>, vector<1x8x128xi32>
      %104 = vector.shape_cast %103 : vector<1x8x128xi32> to vector<8x128xi32>
      %105 = vector.broadcast %arg14 : vector<8x1xi32> to vector<8x128xi32>
      %106 = arith.cmpi eq, %24, %105 : vector<8x128xi32>
      %c0_i32_45 = arith.constant 0 : i32
      %107 = vector.broadcast %c0_i32_45 : i32 to vector<8x128xi32>
      %108 = arith.select %106, %104, %107 : vector<8x128xi1>, vector<8x128xi32>
      %cst_46 = arith.constant dense<0> : vector<8xi32>
      %109 = vector.multi_reduction <add>, %108, %cst_46 [1] : vector<8x128xi32> to vector<8xi32>
      %110 = vector.shape_cast %109 : vector<8xi32> to vector<8x1xi32>
      %c1_i32_47 = arith.constant 1 : i32
      %111 = arith.subi %101, %c1_i32_47 : i32
      %112 = vector.broadcast %111 : i32 to vector<8x128xi32>
      %113 = arith.cmpi eq, %25, %112 : vector<8x128xi32>
      %114 = vector.shape_cast %110 : vector<8x1xi32> to vector<8x1xi32>
      %115 = vector.broadcast %114 : vector<8x1xi32> to vector<8x128xi32>
      %116 = arith.select %113, %115, %arg15 : vector<8x128xi1>, vector<8x128xi32>
      scf.yield %110, %116 : vector<8x1xi32>, vector<8x128xi32>
    }
    %c7_i32_39 = arith.constant 7 : i32
    %c0_40 = arith.constant 0 : index
    %c0_41 = arith.constant 0 : index
    %100 = vector.load %arg10[%c0_40, %c0_41] : memref<8x128xi32, #tpu.memory_space<vmem>>, vector<8x128xi32>
    tpu.vector_store %arg10[%c0_40, %c0_41], %99#1 {strides = array<i32>} : memref<8x128xi32, #tpu.memory_space<vmem>>, vector<8x128xi32>,
    return
  }
  func.func @transform_0(%arg0: i32, %arg1: memref<1xi32, #tpu.memory_space<smem>>) -> (i32, i32, i32) {
    %c0_i32 = arith.constant 0 : i32
    %c0_i32_0 = arith.constant 0 : i32
    %c0_i32_1 = arith.constant 0 : i32
    return %c0_i32, %arg0, %c0_i32_0 : i32, i32, i32
  }
  func.func @transform_1(%arg0: i32, %arg1: memref<1xi32, #tpu.memory_space<smem>>) -> (i32, i32) {
    %c0_i32 = arith.constant 0 : i32
    %c0_i32_0 = arith.constant 0 : i32
    return %arg0, %c0_i32 : i32, i32
  }
  func.func @transform_2(%arg0: i32, %arg1: memref<1xi32, #tpu.memory_space<smem>>) -> (i32, i32) {
    %c0_i32 = arith.constant 0 : i32
    %c0_i32_0 = arith.constant 0 : i32
    %c0_i32_1 = arith.constant 0 : i32
    return %c0_i32, %c0_i32_0 : i32, i32
  }
  func.func @transform_3(%arg0: i32, %arg1: memref<1xi32, #tpu.memory_space<smem>>) -> (i32, i32) {
    %c0_i32 = arith.constant 0 : i32
    %c0_i32_0 = arith.constant 0 : i32
    %c0_i32_1 = arith.constant 0 : i32
    return %c0_i32, %c0_i32_0 : i32, i32
  }
  func.func @transform_4(%arg0: i32, %arg1: memref<1xi32, #tpu.memory_space<smem>>) -> (i32, i32) {
    %c0_i32 = arith.constant 0 : i32
    %c0_i32_0 = arith.constant 0 : i32
    %c0_i32_1 = arith.constant 0 : i32
    return %c0_i32, %c0_i32_0 : i32, i32
  }
  func.func @transform_5(%arg0: i32, %arg1: memref<1xi32, #tpu.memory_space<smem>>) -> (i32, i32) {
    %c0_i32 = arith.constant 0 : i32
    %c0_i32_0 = arith.constant 0 : i32
    %c0_i32_1 = arith.constant 0 : i32
    return %c0_i32, %c0_i32_0 : i32, i32
  }
  func.func @transform_6(%arg0: i32, %arg1: memref<1xi32, #tpu.memory_space<smem>>) -> (i32, i32, i32) {
    %c0_i32 = arith.constant 0 : i32
    %c0_i32_0 = arith.constant 0 : i32
    %c0_i32_1 = arith.constant 0 : i32
    return %c0_i32, %arg0, %c0_i32_0 : i32, i32, i32
  }
  func.func @transform_7(%arg0: i32, %arg1: memref<1xi32, #tpu.memory_space<smem>>) -> (i32, i32) {
    %c0_i32 = arith.constant 0 : i32
    %c0_i32_0 = arith.constant 0 : i32
    return %arg0, %c0_i32 : i32, i32
  }
  func.func @transform_8(%arg0: i32, %arg1: memref<1xi32, #tpu.memory_space<smem>>) -> (i32, i32) {
    %c0_i32 = arith.constant 0 : i32
    %c0_i32_0 = arith.constant 0 : i32
    return %arg0, %c0_i32 : i32, i32
  }
}

</mosaic_0001>

<llo_original>
// kernel: tpu_custom_call.1
$region0: #{tpu_custom_call.1}
  #allocation0 [shape = 'u32[]', space=smem, size = 0x4, offset = 0x4, fixed_abs, tag = 'smem constant byte address 0x4 - core index']
  #allocation1 [shape = 'u32[144,128]{1,0:T(1,128)}', space=vmem, size = 0x12000, scoped, tag = 'internal scratch']
  #allocation2 [shape = 'f32[8,8,128]{2,1,0:T(8,128)}', space=vmem, size = 0x8000, scoped, tag = 'scratch operand']
  #allocation3 [shape = 's32[8,8,128]{2,1,0:T(8,128)}', space=vmem, size = 0x8000, scoped, tag = 'scratch operand']
  #allocation4 [shape = 's32[1]{0}', space=sflag, size = 0x4, scoped, tag = 'scoped memory for tpu_custom_call.1']
  #allocation5 [shape = 's32[1]{0:T(128)S(6)}', space=smem, size = 0x200, scoped, tag = 'prefetched SMEM operand 0']
  %s0 = inlined_call_operand.<no memory space> [shape: s32[1], index: 0, kind: input, shape index: {}]
  %s1 = inlined_call_operand.vmem [shape: f32[8,8,32], index: 1, kind: input, shape index: {}]
  %s2 = inlined_call_operand.vmem [shape: s32[8,1], index: 2, kind: input, shape index: {}]
  %s3 = inlined_call_operand.vmem [shape: bf16[32,128], index: 3, kind: input, shape index: {}]
  %s4 = inlined_call_operand.vmem [shape: f32[1,128], index: 4, kind: input, shape index: {}]
  %s5 = inlined_call_operand.hbm [shape: f32[128,128], index: 5, kind: input, shape index: {}]
  %s6 = inlined_call_operand.vmem [shape: f32[1,128], index: 6, kind: input, shape index: {}]
  %s7 = inlined_call_operand.vmem [shape: s32[8,8,1], index: 7, kind: input, shape index: {}]
  %s8 = inlined_call_operand.hbm [shape: f32[8,128], index: 8, kind: output, shape index: {0}]
  %s9 = inlined_call_operand.hbm [shape: s32[8,128], index: 9, kind: output, shape index: {1}]
  %10 = xla_tuple %s8, %s9
  %s11 = sld [smem:[#allocation0]]
  $region64: #{tpu_custom_call.1} parent=0
    _
  %s13 = ssub.s32 1, %s11
  %s14 = scalar_select 0, %s13, %s11
  %15 = sst [smem:[#allocation5]] %s0
  $region1: #{tpu_custom_call.1} parent=0
    #allocation6 [shape = 'u8[65536]{0}', space=vmem, size = 0x10000, scoped, tag = 'input window, operand 5, single buffered']
    #allocation7 [shape = 's32[1]{0}', space=sflag, size = 0x4, scoped, tag = 'scoped memory for tpu_custom_call.1']
    #allocation8 [shape = 's32[1]{0}', space=sflag, size = 0x4, scoped, tag = 'scoped memory for tpu_custom_call.1']
    #allocation9 [shape = 'u8[4096]{0}', space=vmem, size = 0x1000, scoped, tag = 'output window, operand 0, single buffered']
    #allocation10 [shape = 'u8[4096]{0}', space=vmem, size = 0x1000, scoped, tag = 'output window, operand 1, single buffered']
    #allocation11 [shape = 's32[1]{0}', space=sflag, size = 0x4, scoped, tag = 'scoped memory for tpu_custom_call.1']
    %16 = vsyncpa [#allocation7], 0
    %17 = vsyncpa [#allocation8], 0
    %18 = vsyncpa [#allocation11], 0
    // Predicated region
    $region2: #{tpu_custom_call.1} parent=1 // pred_check
      _
    $region3: #{tpu_custom_call.1} parent=1 // pred_check_branch
      %20 = sbr.rel (0) target = $region5
    $region4: #{tpu_custom_call.1} parent=1 // pred_region
      _
    $region5: #{tpu_custom_call.1} parent=1 // pred_fallthru
      _
    // Predicated region
    $region6: #{tpu_custom_call.1} parent=1 // pred_check
      _
    $region7: #{tpu_custom_call.1} parent=1 // pred_check_branch
      %22 = sbr.rel (0) target = $region9
    $region8: #{tpu_custom_call.1} parent=1 // pred_region
      _
    $region9: #{tpu_custom_call.1} parent=1 // pred_fallthru
      _
    // Predicated region
    $region10: #{tpu_custom_call.1} parent=1 // pred_check
      _
    $region11: #{tpu_custom_call.1} parent=1 // pred_check_branch
      %24 = sbr.rel (0) target = $region13
    $region12: #{tpu_custom_call.1} parent=1 // pred_region
      _
    $region13: #{tpu_custom_call.1} parent=1 // pred_fallthru
      _
    // Predicated region
    $region14: #{tpu_custom_call.1} parent=1 // pred_check
      _
    $region15: #{tpu_custom_call.1} parent=1 // pred_check_branch
      %26 = sbr.rel (0) target = $region17
    $region16: #{tpu_custom_call.1} parent=1 // pred_region
      _
    $region17: #{tpu_custom_call.1} parent=1 // pred_fallthru
      _
    // Predicated region
    $region18: #{tpu_custom_call.1} parent=1 // pred_check
      _
    $region19: #{tpu_custom_call.1} parent=1 // pred_check_branch
      %28 = sbr.rel (0) target = $region21
    $region20: #{tpu_custom_call.1} parent=1 // pred_region
      %s30 = ssub.s32 2048, 2048
      %31 = vsyncadd [#allocation7], %s30
      %s32 = sshll.u32 [#allocation6], 4
      %s33 = int_to_ptr.vmem [resolvable:$true] %s32
      %38 = dma.hbm_to_vmem [thread:$0]  %s5, 2048, %s33, [#allocation7], 128, 128, 8
    $region21: #{tpu_custom_call.1} parent=1 // pred_fallthru
      _
    // Predicated region
    $region22: #{tpu_custom_call.1} parent=1 // pred_check
      _
    $region23: #{tpu_custom_call.1} parent=1 // pred_check_branch
      %40 = sbr.rel (0) target = $region25
    $region24: #{tpu_custom_call.1} parent=1 // pred_region
      _
    $region25: #{tpu_custom_call.1} parent=1 // pred_fallthru
      _
    // Predicated region
    $region26: #{tpu_custom_call.1} parent=1 // pred_check
      _
    $region27: #{tpu_custom_call.1} parent=1 // pred_check_branch
      %42 = sbr.rel (0) target = $region29
    $region28: #{tpu_custom_call.1} parent=1 // pred_region
      _
    $region29: #{tpu_custom_call.1} parent=1 // pred_fallthru
      _
    // Predicated region
    $region30: #{tpu_custom_call.1} parent=1 // pred_check
      _
    $region31: #{tpu_custom_call.1} parent=1 // pred_check_branch
      %44 = sbr.rel (0) target = $region33
    $region32: #{tpu_custom_call.1} parent=1 // pred_region
      %45 = dma.done [#allocation7], 2048
    $region33: #{tpu_custom_call.1} parent=1 // pred_fallthru
      _
    %v47 = vld [vmem:[%s1] sm:$0xff]
    %v48 = vld [vmem:[%s1 + $0x8] sm:$0xff]
    %v49 = vld [vmem:[%s1 + $0x10] sm:$0xff]
    %v50 = vld [vmem:[%s1 + $0x18] sm:$0xff]
    %v51 = vld [vmem:[%s1 + $0x20] sm:$0xff]
    %v52 = vld [vmem:[%s1 + $0x28] sm:$0xff]
    %v53 = vld [vmem:[%s1 + $0x30] sm:$0xff]
    %v54 = vld [vmem:[%s1 + $0x38] sm:$0xff]
    %v55 = vpack.c.bf16 %v48, %v47
    %v56 = vpack.c.bf16 %v50, %v49
    %v57 = vpack.c.bf16 %v52, %v51
    %v58 = vpack.c.bf16 %v54, %v53
    %v59 = vld [vmem:[%s3] sm:$0xf]
    %v60 = vld [vmem:[%s3 + $0x4] sm:$0xf]
    %v61 = vld [vmem:[%s3 + $0x8] sm:$0xf]
    %v62 = vld [vmem:[%s3 + $0xc] sm:$0xf]
    %v63 = vld [vmem:[%s4] sm:$0x1]
    %v65 = vlaneseq
    %v66 = vshrl.u32 %v65, 7
    %v67 = vsub.s32 0, %v66
    %v68 = vrot.slane %v63, %v67
    %v74 = vunpack.c.l.b16 %v59
    %v75 = vunpack.c.l.b16 %v60
    %v76 = vunpack.c.l.b16 %v61
    %v77 = vunpack.c.l.b16 %v62
    %v78 = vpack.c.b16 %v75, %v74
    %v79 = vpack.c.b16 %v77, %v76
    %vm82 = vcmask 261120
    %v84 = vsel %vm82, %v55, 0
    %v87 = vsel %vm82, %v56, 0
    %v90 = vsel %vm82, %v57, 0
    %v93 = vsel %vm82, %v58, 0
    %95 = vmatprep.subr.bf16.mxu0 0
    %96 = vmatpush1.bf16.msra.mxu0 %v78
    %97 = vmatprep.subr.bf16.mxu0 0
    %98 = vmatpush1.bf16.msra.mxu0 %v79
    %99 = vmatprep.subr.bf16.mxu0 0
    %100 = vmatpush1.bf16.msra.mxu0 0
    %101 = vmatprep.subr.bf16.mxu0 0
    %102 = vmatpush1.bf16.msra.mxu0 0
    %103 = vmatprep.subr.bf16.mxu0 0
    %104 = vmatpush1.bf16.msra.mxu0 0
    %105 = vmatprep.subr.bf16.mxu0 0
    %106 = vmatpush1.bf16.msra.mxu0 0
    %107 = vmatprep.subr.bf16.mxu0 0
    %108 = vmatpush1.bf16.msra.mxu0 0
    %109 = vmatprep.subr.bf16.mxu0 0
    %110 = vmatpush1.bf16.msra.mxu0 0
    %111 = vmatprep.subr.bf16.mxu0 0
    %112 = vmatpush1.bf16.msra.mxu0 0
    %113 = vmatprep.subr.bf16.mxu0 0
    %114 = vmatpush1.bf16.msra.mxu0 0
    %115 = vmatprep.subr.bf16.mxu0 0
    %116 = vmatpush1.bf16.msra.mxu0 0
    %117 = vmatprep.subr.bf16.mxu0 0
    %118 = vmatpush1.bf16.msra.mxu0 0
    %119 = vmatprep.subr.bf16.mxu0 0
    %120 = vmatpush1.bf16.msra.mxu0 0
    %121 = vmatprep.subr.bf16.mxu0 0
    %122 = vmatpush1.bf16.msra.mxu0 0
    %123 = vmatprep.subr.bf16.mxu0 0
    %124 = vmatpush1.bf16.msra.mxu0 0
    %125 = vmatprep.subr.bf16.mxu0 0
    %126 = vmatpush1.bf16.msra.mxu0 0
    %127 = vmatprep.mubr.bf16.mxu0 0
    %128 = vmatmul.mubr.bf16.gmra.mrb[0].mxu0 %v84
    %v129 = vpop.f32.mrb[0].mxu0
    %v130 = vadd.f32 %v68, %v129
    %v131 = vpop.f32.mrb[0].mxu0
    %v132 = vpop.f32.mrb[0].mxu0
    %v133 = vadd.f32 %v68, %v132
    %v134 = vpop.f32.mrb[0].mxu0
    %135 = vmatprep.mubr.bf16.mxu0 0
    %136 = vmatmul.mubr.bf16.gmra.mrb[0].mxu0 %v87
    %v137 = vpop.f32.mrb[0].mxu0
    %v138 = vadd.f32 %v68, %v137
    %v139 = vpop.f32.mrb[0].mxu0
    %v140 = vpop.f32.mrb[0].mxu0
    %v141 = vadd.f32 %v68, %v140
    %v142 = vpop.f32.mrb[0].mxu0
    %143 = vmatprep.mubr.bf16.mxu0 0
    %144 = vmatmul.mubr.bf16.gmra.mrb[0].mxu0 %v90
    %v145 = vpop.f32.mrb[0].mxu0
    %v146 = vadd.f32 %v68, %v145
    %v147 = vpop.f32.mrb[0].mxu0
    %v148 = vpop.f32.mrb[0].mxu0
    %v149 = vadd.f32 %v68, %v148
    %v150 = vpop.f32.mrb[0].mxu0
    %151 = vmatprep.mubr.bf16.mxu0 0
    %152 = vmatmul.mubr.bf16.gmra.mrb[0].mxu0 %v93
    %v153 = vpop.f32.mrb[0].mxu0
    %v154 = vadd.f32 %v68, %v153
    %v155 = vpop.f32.mrb[0].mxu0
    %v156 = vpop.f32.mrb[0].mxu0
    %v157 = vadd.f32 %v68, %v156
    %v158 = vpop.f32.mrb[0].mxu0
    %159 = vdwg.mxu0
    %160 = vst [vmem:[#allocation2] sm:$0xff] %v130
    %161 = vst [vmem:[#allocation2 + $0x8] sm:$0xff] %v133
    %162 = vst [vmem:[#allocation2 + $0x10] sm:$0xff] %v138
    %163 = vst [vmem:[#allocation2 + $0x18] sm:$0xff] %v141
    %164 = vst [vmem:[#allocation2 + $0x20] sm:$0xff] %v146
    %165 = vst [vmem:[#allocation2 + $0x28] sm:$0xff] %v149
    %166 = vst [vmem:[#allocation2 + $0x30] sm:$0xff] %v154
    %167 = vst [vmem:[#allocation2 + $0x38] sm:$0xff] %v157
    %v168 = vld [vmem:[%s2] sm:$0xff]
    %s169 = sld [smem:[#allocation5]]
    %p170 = scmp.gt.s32.totalorder %s169, 1
    %s171 = scalar_select %p170, %s169, 1
    %p172 = scmp.lt.s32.totalorder %s171, 8
    %s173 = scalar_select %p172, %s171, 8
    %v174 = vld [vmem:[#allocation6] sm:$0xff]
    %v175 = vld [vmem:[#allocation6 + $0x8] sm:$0xff]
    %v176 = vld [vmem:[#allocation6 + $0x10] sm:$0xff]
    %v177 = vld [vmem:[#allocation6 + $0x18] sm:$0xff]
    %v178 = vld [vmem:[#allocation6 + $0x20] sm:$0xff]
    %v179 = vld [vmem:[#allocation6 + $0x28] sm:$0xff]
    %v180 = vld [vmem:[#allocation6 + $0x30] sm:$0xff]
    %v181 = vld [vmem:[#allocation6 + $0x38] sm:$0xff]
    %v182 = vld [vmem:[#allocation6 + $0x40] sm:$0xff]
    %v183 = vld [vmem:[#allocation6 + $0x48] sm:$0xff]
    %v184 = vld [vmem:[#allocation6 + $0x50] sm:$0xff]
    %v185 = vld [vmem:[#allocation6 + $0x58] sm:$0xff]
    %v186 = vld [vmem:[#allocation6 + $0x60] sm:$0xff]
    %v187 = vld [vmem:[#allocation6 + $0x68] sm:$0xff]
    %v188 = vld [vmem:[#allocation6 + $0x70] sm:$0xff]
    %v189 = vld [vmem:[#allocation6 + $0x78] sm:$0xff]
    %v190 = vld [vmem:[%s6] sm:$0x1]
    %v191 = vmax.f32 %v174, %v178
    %v192 = vmax.f32 %v175, %v179
    %v193 = vmax.f32 %v176, %v180
    %v194 = vmax.f32 %v177, %v181
    %v195 = vmax.f32 %v191, %v182
    %v196 = vmax.f32 %v192, %v183
    %v197 = vmax.f32 %v193, %v184
    %v198 = vmax.f32 %v194, %v185
    %v199 = vmax.f32 %v195, %v186
    %v200 = vmax.f32 %v196, %v187
    %v201 = vmax.f32 %v197, %v188
    %v202 = vmax.f32 %v198, %v189
    %v203 = vmax.f32 %v199, %v200
    %v204 = vmax.f32 %v201, %v202
    %v205 = vmax.f32 %v203, %v204
    %v206 = vrot.slane %v205, 4
    %v207 = vmax.f32 %v205, %v206
    %v208 = vrot.slane %v207, 2
    %v209 = vmax.f32 %v207, %v208
    %v210 = vrot.slane %v209, 1
    %v211 = vmax.f32 %v209, %v210
    %v212 = vsub.f32 %v174, %v211
    %v213 = vsub.f32 %v175, %v211
    %v214 = vsub.f32 %v176, %v211
    %v215 = vsub.f32 %v177, %v211
    %v216 = vsub.f32 %v178, %v211
    %v217 = vsub.f32 %v179, %v211
    %v218 = vsub.f32 %v180, %v211
    %v219 = vsub.f32 %v181, %v211
    %v220 = vsub.f32 %v182, %v211
    %v221 = vsub.f32 %v183, %v211
    %v222 = vsub.f32 %v184, %v211
    %v223 = vsub.f32 %v185, %v211
    %v224 = vsub.f32 %v186, %v211
    %v225 = vsub.f32 %v187, %v211
    %v226 = vsub.f32 %v188, %v211
    %v227 = vsub.f32 %v189, %v211
    %v228 = vmul.f32 %v212, 1.442695
    %v229 = vpow.pop %v228
    %v230 = vmul.f32 %v213, 1.442695
    %v231 = vpow.pop %v230
    %v232 = vmul.f32 %v214, 1.442695
    %v233 = vpow.pop %v232
    %v234 = vmul.f32 %v215, 1.442695
    %v235 = vpow.pop %v234
    %v236 = vmul.f32 %v216, 1.442695
    %v237 = vpow.pop %v236
    %v238 = vmul.f32 %v217, 1.442695
    %v239 = vpow.pop %v238
    %v240 = vmul.f32 %v218, 1.442695
    %v241 = vpow.pop %v240
    %v242 = vmul.f32 %v219, 1.442695
    %v243 = vpow.pop %v242
    %v244 = vmul.f32 %v220, 1.442695
    %v245 = vpow.pop %v244
    %v246 = vmul.f32 %v221, 1.442695
    %v247 = vpow.pop %v246
    %v248 = vmul.f32 %v222, 1.442695
    %v249 = vpow.pop %v248
    %v250 = vmul.f32 %v223, 1.442695
    %v251 = vpow.pop %v250
    %v252 = vmul.f32 %v224, 1.442695
    %v253 = vpow.pop %v252
    %v254 = vmul.f32 %v225, 1.442695
    %v255 = vpow.pop %v254
    %v256 = vmul.f32 %v226, 1.442695
    %v257 = vpow.pop %v256
    %v258 = vmul.f32 %v227, 1.442695
    %v259 = vpow.pop %v258
    %v260 = vlaneseq
    %v261 = vshrl.u32 %v260, 7
    %v262 = vadd.s32 %v261, 8
    %v263 = vadd.s32 %v261, 16
    %v264 = vadd.s32 %v261, 24
    %v265 = vadd.s32 %v261, 32
    %v266 = vadd.s32 %v261, 40
    %v267 = vadd.s32 %v261, 48
    %v268 = vadd.s32 %v261, 56
    %v269 = vadd.s32 %v261, 64
    %v270 = vadd.s32 %v261, 72
    %v271 = vadd.s32 %v261, 80
    %v272 = vadd.s32 %v261, 88
    %v273 = vadd.s32 %v261, 96
    %v274 = vadd.s32 %v261, 104
    %v275 = vadd.s32 %v261, 112
    %v276 = vadd.s32 %v261, 120
    %v277 = vlaneseq
    %v278 = vand.u32 %v277, 127
    %v279 = vld [vmem:[%s7] sm:$0xff]
    %v280 = vld [vmem:[%s7 + $0x8] sm:$0xff]
    %v281 = vld [vmem:[%s7 + $0x10] sm:$0xff]
    %v282 = vld [vmem:[%s7 + $0x18] sm:$0xff]
    %v283 = vld [vmem:[%s7 + $0x20] sm:$0xff]
    %v284 = vld [vmem:[%s7 + $0x28] sm:$0xff]
    %v285 = vld [vmem:[%s7 + $0x30] sm:$0xff]
    %v286 = vld [vmem:[%s7 + $0x38] sm:$0xff]
    %287 = vset.pattern.permute.xlu0 0
    %288 = vperm.xlu0 %287, %v279
    %v289 = vpop.permute.xlu0 %288
    %290 = vset.pattern.permute.xlu0 0
    %291 = vperm.xlu0 %290, %v280
    %v292 = vpop.permute.xlu0 %291
    %293 = vset.pattern.permute.xlu0 0
    %294 = vperm.xlu0 %293, %v281
    %v295 = vpop.permute.xlu0 %294
    %296 = vset.pattern.permute.xlu0 0
    %297 = vperm.xlu0 %296, %v282
    %v298 = vpop.permute.xlu0 %297
    %299 = vset.pattern.permute.xlu0 0
    %300 = vperm.xlu0 %299, %v283
    %v301 = vpop.permute.xlu0 %300
    %302 = vset.pattern.permute.xlu0 0
    %303 = vperm.xlu0 %302, %v284
    %v304 = vpop.permute.xlu0 %303
    %305 = vset.pattern.permute.xlu0 0
    %306 = vperm.xlu0 %305, %v285
    %v307 = vpop.permute.xlu0 %306
    %308 = vset.pattern.permute.xlu0 0
    %309 = vperm.xlu0 %308, %v286
    %v310 = vpop.permute.xlu0 %309
    %vm311 = vcmp.eq.s32.totalorder %v278, %v289
    %vm312 = vcmp.eq.s32.totalorder %v278, %v292
    %vm313 = vcmp.eq.s32.totalorder %v278, %v295
    %vm314 = vcmp.eq.s32.totalorder %v278, %v298
    %vm315 = vcmp.eq.s32.totalorder %v278, %v301
    %vm316 = vcmp.eq.s32.totalorder %v278, %v304
    %vm317 = vcmp.eq.s32.totalorder %v278, %v307
    %vm318 = vcmp.eq.s32.totalorder %v278, %v310
    %vm319 = vcmp.gt.s32.totalorder %v168, 0
    %vm320 = vcmp.gt.s32.totalorder %v168, 1
    %vm321 = vcmp.gt.s32.totalorder %v168, 2
    %vm322 = vcmp.gt.s32.totalorder %v168, 3
    %vm323 = vcmp.gt.s32.totalorder %v168, 4
    %vm324 = vcmp.gt.s32.totalorder %v168, 5
    %vm325 = vcmp.gt.s32.totalorder %v168, 6
    %vm326 = vcmp.gt.s32.totalorder %v168, 7
    %v327 = vsel %vm319, 1, 0
    %v328 = vsel %vm320, 1, 0
    %v329 = vsel %vm321, 1, 0
    %v330 = vsel %vm322, 1, 0
    %v331 = vsel %vm323, 1, 0
    %v332 = vsel %vm324, 1, 0
    %v333 = vsel %vm325, 1, 0
    %v334 = vsel %vm326, 1, 0
    %335 = vset.pattern.permute.xlu0 0
    %336 = vperm.xlu0 %335, %v327
    %v337 = vpop.permute.xlu0 %336
    %338 = vset.pattern.permute.xlu0 0
    %339 = vperm.xlu0 %338, %v328
    %v340 = vpop.permute.xlu0 %339
    %341 = vset.pattern.permute.xlu0 0
    %342 = vperm.xlu0 %341, %v329
    %v343 = vpop.permute.xlu0 %342
    %344 = vset.pattern.permute.xlu0 0
    %345 = vperm.xlu0 %344, %v330
    %v346 = vpop.permute.xlu0 %345
    %347 = vset.pattern.permute.xlu0 0
    %348 = vperm.xlu0 %347, %v331
    %v349 = vpop.permute.xlu0 %348
    %350 = vset.pattern.permute.xlu0 0
    %351 = vperm.xlu0 %350, %v332
    %v352 = vpop.permute.xlu0 %351
    %353 = vset.pattern.permute.xlu0 0
    %354 = vperm.xlu0 %353, %v333
    %v355 = vpop.permute.xlu0 %354
    %356 = vset.pattern.permute.xlu0 0
    %357 = vperm.xlu0 %356, %v334
    %v358 = vpop.permute.xlu0 %357
    %vm359 = vcmp.eq.s32.totalorder %v337, 1
    %vm360 = vcmp.eq.s32.totalorder %v340, 1
    %vm361 = vcmp.eq.s32.totalorder %v343, 1
    %vm362 = vcmp.eq.s32.totalorder %v346, 1
    %vm363 = vcmp.eq.s32.totalorder %v349, 1
    %vm364 = vcmp.eq.s32.totalorder %v352, 1
    %vm365 = vcmp.eq.s32.totalorder %v355, 1
    %vm366 = vcmp.eq.s32.totalorder %v358, 1
    %vm367 = vmand %vm311, %vm359
    %vm368 = vmand %vm312, %vm360
    %vm369 = vmand %vm313, %vm361
    %vm370 = vmand %vm314, %vm362
    %vm371 = vmand %vm315, %vm363
    %vm372 = vmand %vm316, %vm364
    %vm373 = vmand %vm317, %vm365
    %vm374 = vmand %vm318, %vm366
    %v375 = vsel %vm367, %v130, 0.0
    %v376 = vsel %vm368, %v133, 0.0
    %v377 = vsel %vm369, %v138, 0.0
    %v378 = vsel %vm370, %v141, 0.0
    %v379 = vsel %vm371, %v146, 0.0
    %v380 = vsel %vm372, %v149, 0.0
    %v381 = vsel %vm373, %v154, 0.0
    %v382 = vsel %vm374, %v157, 0.0
    %383 = vadd.xlane.f32.xlu0 %v375
    %v384 = vpop.xlane.xlu0 %383
    %385 = vadd.xlane.f32.xlu0 %v376
    %v386 = vpop.xlane.xlu0 %385
    %387 = vadd.xlane.f32.xlu0 %v377
    %v388 = vpop.xlane.xlu0 %387
    %389 = vadd.xlane.f32.xlu0 %v378
    %v390 = vpop.xlane.xlu0 %389
    %391 = vadd.xlane.f32.xlu0 %v379
    %v392 = vpop.xlane.xlu0 %391
    %393 = vadd.xlane.f32.xlu0 %v380
    %v394 = vpop.xlane.xlu0 %393
    %395 = vadd.xlane.f32.xlu0 %v381
    %v396 = vpop.xlane.xlu0 %395
    %397 = vadd.xlane.f32.xlu0 %v382
    %v398 = vpop.xlane.xlu0 %397
    %v399 = vadd.f32 %v384, %v386
    %v400 = vadd.f32 %v399, %v388
    %v401 = vadd.f32 %v400, %v390
    %v402 = vadd.f32 %v401, %v392
    %v403 = vadd.f32 %v402, %v394
    %v404 = vadd.f32 %v403, %v396
    %v405 = vadd.f32 %v404, %v398
    %406 = vst [vmem:[#allocation3] sm:$0xff] %v278
    %407 = vst [vmem:[#allocation3 + $0x8] sm:$0xff] %v278
    %408 = vst [vmem:[#allocation3 + $0x10] sm:$0xff] %v278
    %409 = vst [vmem:[#allocation3 + $0x18] sm:$0xff] %v278
    %410 = vst [vmem:[#allocation3 + $0x20] sm:$0xff] %v278
    %411 = vst [vmem:[#allocation3 + $0x28] sm:$0xff] %v278
    %412 = vst [vmem:[#allocation3 + $0x30] sm:$0xff] %v278
    %413 = vst [vmem:[#allocation3 + $0x38] sm:$0xff] %v278
    %v414 = vlaneseq
    %v415 = vshrl.u32 %v414, 7
    %v416 = vsub.s32 2, %v415
    %v417 = vrot.slane %v175, %v416
    %v418 = vadd.f32 %v417, %v130
    // While loop
    $region34: #{tpu_custom_call.1} parent=1 // loop_pre_header
      _
    $region35: #{tpu_custom_call.1} parent=1 // loop_header
      %s420 = sphi 1, %s422
      %p421 = scmp.ge.s32.totalorder %s420, %s173
      %v425 = vphi %v418, %v1959
      %v426 = vphi %v418, %v1983
    $region36: #{tpu_custom_call.1} parent=1 // loop_header_branch
      %424 = sbr.rel (%p421) target = $region40
    $region37: #{tpu_custom_call.1} parent=1 // loop_body
      %s427 = smul.u32 %s420, 8
      %s428 = scalar_lea.vmem [#allocation2], %s427
      %v429 = vld [vmem:[%s428] sm:$0xff]
      %v430 = vstv %s420
      %vm431 = vcmp.lt.s32.totalorder %v430, %v168
      %432 = vmax.xlane.f32.xlu0 %v425
      %v433 = vpop.xlane.xlu0 %432
      %v434 = vsub.f32 %v425, %v433
      %v435 = vmul.f32 %v434, 1.442695
      %v436 = vpow.pop %v435
      %437 = vmatprep.subr.mxu0 0.0
      %438 = vmatpush1.msra.mxu0 %v229
      %439 = vmatprep.subr.mxu0 0.0
      %440 = vmatpush1.msra.mxu0 %v231
      %441 = vmatprep.subr.mxu0 0.0
      %442 = vmatpush1.msra.mxu0 %v233
      %443 = vmatprep.subr.mxu0 0.0
      %444 = vmatpush1.msra.mxu0 %v235
      %445 = vmatprep.subr.mxu0 0.0
      %446 = vmatpush1.msra.mxu0 %v237
      %447 = vmatprep.subr.mxu0 0.0
      %448 = vmatpush1.msra.mxu0 %v239
      %449 = vmatprep.subr.mxu0 0.0
      %450 = vmatpush1.msra.mxu0 %v241
      %451 = vmatprep.subr.mxu0 0.0
      %452 = vmatpush1.msra.mxu0 %v243
      %453 = vmatprep.subr.mxu0 0.0
      %454 = vmatpush1.msra.mxu0 %v245
      %455 = vmatprep.subr.mxu0 0.0
      %456 = vmatpush1.msra.mxu0 %v247
      %457 = vmatprep.subr.mxu0 0.0
      %458 = vmatpush1.msra.mxu0 %v249
      %459 = vmatprep.subr.mxu0 0.0
      %460 = vmatpush1.msra.mxu0 %v251
      %461 = vmatprep.subr.mxu0 0.0
      %462 = vmatpush1.msra.mxu0 %v253
      %463 = vmatprep.subr.mxu0 0.0
      %464 = vmatpush1.msra.mxu0 %v255
      %465 = vmatprep.subr.mxu0 0.0
      %466 = vmatpush1.msra.mxu0 %v257
      %467 = vmatprep.subr.mxu0 0.0
      %468 = vmatpush1.msra.mxu0 %v259
      %469 = vmatprep.subr.mxu0 0.0
      %470 = vmatpush1.msra.mxu0 0.0
      %471 = vmatprep.subr.mxu0 0.0
      %472 = vmatpush1.msra.mxu0 0.0
      %473 = vmatprep.subr.mxu0 0.0
      %474 = vmatpush1.msra.mxu0 0.0
      %475 = vmatprep.subr.mxu0 0.0
      %476 = vmatpush1.msra.mxu0 0.0
      %477 = vmatprep.subr.mxu0 0.0
      %478 = vmatpush1.msra.mxu0 0.0
      %479 = vmatprep.subr.mxu0 0.0
      %480 = vmatpush1.msra.mxu0 0.0
      %481 = vmatprep.subr.mxu0 0.0
      %482 = vmatpush1.msra.mxu0 0.0
      %483 = vmatprep.subr.mxu0 0.0
      %484 = vmatpush1.msra.mxu0 0.0
      %485 = vmatprep.subr.mxu0 0.0
      %486 = vmatpush1.msra.mxu0 0.0
      %487 = vmatprep.subr.mxu0 0.0
      %488 = vmatpush1.msra.mxu0 0.0
      %489 = vmatprep.subr.mxu0 0.0
      %490 = vmatpush1.msra.mxu0 0.0
      %491 = vmatprep.subr.mxu0 0.0
      %492 = vmatpush1.msra.mxu0 0.0
      %493 = vmatprep.subr.mxu0 0.0
      %494 = vmatpush1.msra.mxu0 0.0
      %495 = vmatprep.subr.mxu0 0.0
      %496 = vmatpush1.msra.mxu0 0.0
      %497 = vmatprep.subr.mxu0 0.0
      %498 = vmatpush1.msra.mxu0 0.0
      %499 = vmatprep.subr.mxu0 0.0
      %500 = vmatpush1.msra.mxu0 0.0
      %501 = vmatprep.mubr.f32.mxu0 0.0
      %502 = vmatmul.mubr.f32.gmra.mrb[0].mxu0 %v436
      %v503 = vpop.f32.mrb[0].mxu0
      %v504 = vadd.f32 0.0, %v503
      %v505 = vpop.f32.mrb[0].mxu0
      %506 = vdwg.mxu0
      %v507 = vmax.f32 %v504, 1e-30
      %v508 = vlog2.pop %v507
      %v509 = vmul.f32 %v508, 0.6931472
      %v510 = vadd.f32 %v509, %v433
      %v511 = vadd.f32 %v510, %v211
      %v512 = vadd.f32 %v511, %v429
      %v513 = vlaneseq
      %v514 = vshrl.u32 %v513, 7
      %v515 = vsub.s32 0, %v514
      %v516 = vrot.slane %v426, %v515
      %518 = vbcast.lane.b32.xlu0 %v516, 256
      %v519 = vpop.permute.xlu0 %518
      %s521 = sor.u32 256, 8
      %522 = vbcast.lane.b32.xlu0 %v516, %s521
      %v523 = vpop.permute.xlu0 %522
      %s525 = sor.u32 256, 16
      %526 = vbcast.lane.b32.xlu0 %v516, %s525
      %v527 = vpop.permute.xlu0 %526
      %s529 = sor.u32 256, 24
      %530 = vbcast.lane.b32.xlu0 %v516, %s529
      %v531 = vpop.permute.xlu0 %530
      %s533 = sor.u32 256, 32
      %534 = vbcast.lane.b32.xlu0 %v516, %s533
      %v535 = vpop.permute.xlu0 %534
      %s537 = sor.u32 256, 40
      %538 = vbcast.lane.b32.xlu0 %v516, %s537
      %v539 = vpop.permute.xlu0 %538
      %s541 = sor.u32 256, 48
      %542 = vbcast.lane.b32.xlu0 %v516, %s541
      %v543 = vpop.permute.xlu0 %542
      %s545 = sor.u32 256, 56
      %546 = vbcast.lane.b32.xlu0 %v516, %s545
      %v547 = vpop.permute.xlu0 %546
      %s549 = sor.u32 256, 64
      %550 = vbcast.lane.b32.xlu0 %v516, %s549
      %v551 = vpop.permute.xlu0 %550
      %s553 = sor.u32 256, 72
      %554 = vbcast.lane.b32.xlu0 %v516, %s553
      %v555 = vpop.permute.xlu0 %554
      %s557 = sor.u32 256, 80
      %558 = vbcast.lane.b32.xlu0 %v516, %s557
      %v559 = vpop.permute.xlu0 %558
      %s561 = sor.u32 256, 88
      %562 = vbcast.lane.b32.xlu0 %v516, %s561
      %v563 = vpop.permute.xlu0 %562
      %s565 = sor.u32 256, 96
      %566 = vbcast.lane.b32.xlu0 %v516, %s565
      %v567 = vpop.permute.xlu0 %566
      %s569 = sor.u32 256, 104
      %570 = vbcast.lane.b32.xlu0 %v516, %s569
      %v571 = vpop.permute.xlu0 %570
      %s573 = sor.u32 256, 112
      %574 = vbcast.lane.b32.xlu0 %v516, %s573
      %v575 = vpop.permute.xlu0 %574
      %s577 = sor.u32 256, 120
      %578 = vbcast.lane.b32.xlu0 %v516, %s577
      %v579 = vpop.permute.xlu0 %578
      %v580 = vlaneseq
      %v581 = vshrl.u32 %v580, 7
      %v582 = vsub.s32 1, %v581
      %v583 = vrot.slane %v426, %v582
      %585 = vbcast.lane.b32.xlu0 %v583, 256
      %v586 = vpop.permute.xlu0 %585
      %s588 = sor.u32 256, 8
      %589 = vbcast.lane.b32.xlu0 %v583, %s588
      %v590 = vpop.permute.xlu0 %589
      %s592 = sor.u32 256, 16
      %593 = vbcast.lane.b32.xlu0 %v583, %s592
      %v594 = vpop.permute.xlu0 %593
      %s596 = sor.u32 256, 24
      %597 = vbcast.lane.b32.xlu0 %v583, %s596
      %v598 = vpop.permute.xlu0 %597
      %s600 = sor.u32 256, 32
      %601 = vbcast.lane.b32.xlu0 %v583, %s600
      %v602 = vpop.permute.xlu0 %601
      %s604 = sor.u32 256, 40
      %605 = vbcast.lane.b32.xlu0 %v583, %s604
      %v606 = vpop.permute.xlu0 %605
      %s608 = sor.u32 256, 48
      %609 = vbcast.lane.b32.xlu0 %v583, %s608
      %v610 = vpop.permute.xlu0 %609
      %s612 = sor.u32 256, 56
      %613 = vbcast.lane.b32.xlu0 %v583, %s612
      %v614 = vpop.permute.xlu0 %613
      %s616 = sor.u32 256, 64
      %617 = vbcast.lane.b32.xlu0 %v583, %s616
      %v618 = vpop.permute.xlu0 %617
      %s620 = sor.u32 256, 72
      %621 = vbcast.lane.b32.xlu0 %v583, %s620
      %v622 = vpop.permute.xlu0 %621
      %s624 = sor.u32 256, 80
      %625 = vbcast.lane.b32.xlu0 %v583, %s624
      %v626 = vpop.permute.xlu0 %625
      %s628 = sor.u32 256, 88
      %629 = vbcast.lane.b32.xlu0 %v583, %s628
      %v630 = vpop.permute.xlu0 %629
      %s632 = sor.u32 256, 96
      %633 = vbcast.lane.b32.xlu0 %v583, %s632
      %v634 = vpop.permute.xlu0 %633
      %s636 = sor.u32 256, 104
      %637 = vbcast.lane.b32.xlu0 %v583, %s636
      %v638 = vpop.permute.xlu0 %637
      %s640 = sor.u32 256, 112
      %641 = vbcast.lane.b32.xlu0 %v583, %s640
      %v642 = vpop.permute.xlu0 %641
      %s644 = sor.u32 256, 120
      %645 = vbcast.lane.b32.xlu0 %v583, %s644
      %v646 = vpop.permute.xlu0 %645
      %v647 = vlaneseq
      %v648 = vshrl.u32 %v647, 7
      %v649 = vsub.s32 2, %v648
      %v650 = vrot.slane %v426, %v649
      %652 = vbcast.lane.b32.xlu0 %v650, 256
      %v653 = vpop.permute.xlu0 %652
      %s655 = sor.u32 256, 8
      %656 = vbcast.lane.b32.xlu0 %v650, %s655
      %v657 = vpop.permute.xlu0 %656
      %s659 = sor.u32 256, 16
      %660 = vbcast.lane.b32.xlu0 %v650, %s659
      %v661 = vpop.permute.xlu0 %660
      %s663 = sor.u32 256, 24
      %664 = vbcast.lane.b32.xlu0 %v650, %s663
      %v665 = vpop.permute.xlu0 %664
      %s667 = sor.u32 256, 32
      %668 = vbcast.lane.b32.xlu0 %v650, %s667
      %v669 = vpop.permute.xlu0 %668
      %s671 = sor.u32 256, 40
      %672 = vbcast.lane.b32.xlu0 %v650, %s671
      %v673 = vpop.permute.xlu0 %672
      %s675 = sor.u32 256, 48
      %676 = vbcast.lane.b32.xlu0 %v650, %s675
      %v677 = vpop.permute.xlu0 %676
      %s679 = sor.u32 256, 56
      %680 = vbcast.lane.b32.xlu0 %v650, %s679
      %v681 = vpop.permute.xlu0 %680
      %s683 = sor.u32 256, 64
      %684 = vbcast.lane.b32.xlu0 %v650, %s683
      %v685 = vpop.permute.xlu0 %684
      %s687 = sor.u32 256, 72
      %688 = vbcast.lane.b32.xlu0 %v650, %s687
      %v689 = vpop.permute.xlu0 %688
      %s691 = sor.u32 256, 80
      %692 = vbcast.lane.b32.xlu0 %v650, %s691
      %v693 = vpop.permute.xlu0 %692
      %s695 = sor.u32 256, 88
      %696 = vbcast.lane.b32.xlu0 %v650, %s695
      %v697 = vpop.permute.xlu0 %696
      %s699 = sor.u32 256, 96
      %700 = vbcast.lane.b32.xlu0 %v650, %s699
      %v701 = vpop.permute.xlu0 %700
      %s703 = sor.u32 256, 104
      %704 = vbcast.lane.b32.xlu0 %v650, %s703
      %v705 = vpop.permute.xlu0 %704
      %s707 = sor.u32 256, 112
      %708 = vbcast.lane.b32.xlu0 %v650, %s707
      %v709 = vpop.permute.xlu0 %708
      %s711 = sor.u32 256, 120
      %712 = vbcast.lane.b32.xlu0 %v650, %s711
      %v713 = vpop.permute.xlu0 %712
      %v714 = vlaneseq
      %v715 = vshrl.u32 %v714, 7
      %v716 = vsub.s32 3, %v715
      %v717 = vrot.slane %v426, %v716
      %719 = vbcast.lane.b32.xlu0 %v717, 256
      %v720 = vpop.permute.xlu0 %719
      %s722 = sor.u32 256, 8
      %723 = vbcast.lane.b32.xlu0 %v717, %s722
      %v724 = vpop.permute.xlu0 %723
      %s726 = sor.u32 256, 16
      %727 = vbcast.lane.b32.xlu0 %v717, %s726
      %v728 = vpop.permute.xlu0 %727
      %s730 = sor.u32 256, 24
      %731 = vbcast.lane.b32.xlu0 %v717, %s730
      %v732 = vpop.permute.xlu0 %731
      %s734 = sor.u32 256, 32
      %735 = vbcast.lane.b32.xlu0 %v717, %s734
      %v736 = vpop.permute.xlu0 %735
      %s738 = sor.u32 256, 40
      %739 = vbcast.lane.b32.xlu0 %v717, %s738
      %v740 = vpop.permute.xlu0 %739
      %s742 = sor.u32 256, 48
      %743 = vbcast.lane.b32.xlu0 %v717, %s742
      %v744 = vpop.permute.xlu0 %743
      %s746 = sor.u32 256, 56
      %747 = vbcast.lane.b32.xlu0 %v717, %s746
      %v748 = vpop.permute.xlu0 %747
      %s750 = sor.u32 256, 64
      %751 = vbcast.lane.b32.xlu0 %v717, %s750
      %v752 = vpop.permute.xlu0 %751
      %s754 = sor.u32 256, 72
      %755 = vbcast.lane.b32.xlu0 %v717, %s754
      %v756 = vpop.permute.xlu0 %755
      %s758 = sor.u32 256, 80
      %759 = vbcast.lane.b32.xlu0 %v717, %s758
      %v760 = vpop.permute.xlu0 %759
      %s762 = sor.u32 256, 88
      %763 = vbcast.lane.b32.xlu0 %v717, %s762
      %v764 = vpop.permute.xlu0 %763
      %s766 = sor.u32 256, 96
      %767 = vbcast.lane.b32.xlu0 %v717, %s766
      %v768 = vpop.permute.xlu0 %767
      %s770 = sor.u32 256, 104
      %771 = vbcast.lane.b32.xlu0 %v717, %s770
      %v772 = vpop.permute.xlu0 %771
      %s774 = sor.u32 256, 112
      %775 = vbcast.lane.b32.xlu0 %v717, %s774
      %v776 = vpop.permute.xlu0 %775
      %s778 = sor.u32 256, 120
      %779 = vbcast.lane.b32.xlu0 %v717, %s778
      %v780 = vpop.permute.xlu0 %779
      %v781 = vlaneseq
      %v782 = vshrl.u32 %v781, 7
      %v783 = vsub.s32 4, %v782
      %v784 = vrot.slane %v426, %v783
      %786 = vbcast.lane.b32.xlu0 %v784, 256
      %v787 = vpop.permute.xlu0 %786
      %s789 = sor.u32 256, 8
      %790 = vbcast.lane.b32.xlu0 %v784, %s789
      %v791 = vpop.permute.xlu0 %790
      %s793 = sor.u32 256, 16
      %794 = vbcast.lane.b32.xlu0 %v784, %s793
      %v795 = vpop.permute.xlu0 %794
      %s797 = sor.u32 256, 24
      %798 = vbcast.lane.b32.xlu0 %v784, %s797
      %v799 = vpop.permute.xlu0 %798
      %s801 = sor.u32 256, 32
      %802 = vbcast.lane.b32.xlu0 %v784, %s801
      %v803 = vpop.permute.xlu0 %802
      %s805 = sor.u32 256, 40
      %806 = vbcast.lane.b32.xlu0 %v784, %s805
      %v807 = vpop.permute.xlu0 %806
      %s809 = sor.u32 256, 48
      %810 = vbcast.lane.b32.xlu0 %v784, %s809
      %v811 = vpop.permute.xlu0 %810
      %s813 = sor.u32 256, 56
      %814 = vbcast.lane.b32.xlu0 %v784, %s813
      %v815 = vpop.permute.xlu0 %814
      %s817 = sor.u32 256, 64
      %818 = vbcast.lane.b32.xlu0 %v784, %s817
      %v819 = vpop.permute.xlu0 %818
      %s821 = sor.u32 256, 72
      %822 = vbcast.lane.b32.xlu0 %v784, %s821
      %v823 = vpop.permute.xlu0 %822
      %s825 = sor.u32 256, 80
      %826 = vbcast.lane.b32.xlu0 %v784, %s825
      %v827 = vpop.permute.xlu0 %826
      %s829 = sor.u32 256, 88
      %830 = vbcast.lane.b32.xlu0 %v784, %s829
      %v831 = vpop.permute.xlu0 %830
      %s833 = sor.u32 256, 96
      %834 = vbcast.lane.b32.xlu0 %v784, %s833
      %v835 = vpop.permute.xlu0 %834
      %s837 = sor.u32 256, 104
      %838 = vbcast.lane.b32.xlu0 %v784, %s837
      %v839 = vpop.permute.xlu0 %838
      %s841 = sor.u32 256, 112
      %842 = vbcast.lane.b32.xlu0 %v784, %s841
      %v843 = vpop.permute.xlu0 %842
      %s845 = sor.u32 256, 120
      %846 = vbcast.lane.b32.xlu0 %v784, %s845
      %v847 = vpop.permute.xlu0 %846
      %v848 = vlaneseq
      %v849 = vshrl.u32 %v848, 7
      %v850 = vsub.s32 5, %v849
      %v851 = vrot.slane %v426, %v850
      %853 = vbcast.lane.b32.xlu0 %v851, 256
      %v854 = vpop.permute.xlu0 %853
      %s856 = sor.u32 256, 8
      %857 = vbcast.lane.b32.xlu0 %v851, %s856
      %v858 = vpop.permute.xlu0 %857
      %s860 = sor.u32 256, 16
      %861 = vbcast.lane.b32.xlu0 %v851, %s860
      %v862 = vpop.permute.xlu0 %861
      %s864 = sor.u32 256, 24
      %865 = vbcast.lane.b32.xlu0 %v851, %s864
      %v866 = vpop.permute.xlu0 %865
      %s868 = sor.u32 256, 32
      %869 = vbcast.lane.b32.xlu0 %v851, %s868
      %v870 = vpop.permute.xlu0 %869
      %s872 = sor.u32 256, 40
      %873 = vbcast.lane.b32.xlu0 %v851, %s872
      %v874 = vpop.permute.xlu0 %873
      %s876 = sor.u32 256, 48
      %877 = vbcast.lane.b32.xlu0 %v851, %s876
      %v878 = vpop.permute.xlu0 %877
      %s880 = sor.u32 256, 56
      %881 = vbcast.lane.b32.xlu0 %v851, %s880
      %v882 = vpop.permute.xlu0 %881
      %s884 = sor.u32 256, 64
      %885 = vbcast.lane.b32.xlu0 %v851, %s884
      %v886 = vpop.permute.xlu0 %885
      %s888 = sor.u32 256, 72
      %889 = vbcast.lane.b32.xlu0 %v851, %s888
      %v890 = vpop.permute.xlu0 %889
      %s892 = sor.u32 256, 80
      %893 = vbcast.lane.b32.xlu0 %v851, %s892
      %v894 = vpop.permute.xlu0 %893
      %s896 = sor.u32 256, 88
      %897 = vbcast.lane.b32.xlu0 %v851, %s896
      %v898 = vpop.permute.xlu0 %897
      %s900 = sor.u32 256, 96
      %901 = vbcast.lane.b32.xlu0 %v851, %s900
      %v902 = vpop.permute.xlu0 %901
      %s904 = sor.u32 256, 104
      %905 = vbcast.lane.b32.xlu0 %v851, %s904
      %v906 = vpop.permute.xlu0 %905
      %s908 = sor.u32 256, 112
      %909 = vbcast.lane.b32.xlu0 %v851, %s908
      %v910 = vpop.permute.xlu0 %909
      %s912 = sor.u32 256, 120
      %913 = vbcast.lane.b32.xlu0 %v851, %s912
      %v914 = vpop.permute.xlu0 %913
      %v915 = vlaneseq
      %v916 = vshrl.u32 %v915, 7
      %v917 = vsub.s32 6, %v916
      %v918 = vrot.slane %v426, %v917
      %920 = vbcast.lane.b32.xlu0 %v918, 256
      %v921 = vpop.permute.xlu0 %920
      %s923 = sor.u32 256, 8
      %924 = vbcast.lane.b32.xlu0 %v918, %s923
      %v925 = vpop.permute.xlu0 %924
      %s927 = sor.u32 256, 16
      %928 = vbcast.lane.b32.xlu0 %v918, %s927
      %v929 = vpop.permute.xlu0 %928
      %s931 = sor.u32 256, 24
      %932 = vbcast.lane.b32.xlu0 %v918, %s931
      %v933 = vpop.permute.xlu0 %932
      %s935 = sor.u32 256, 32
      %936 = vbcast.lane.b32.xlu0 %v918, %s935
      %v937 = vpop.permute.xlu0 %936
      %s939 = sor.u32 256, 40
      %940 = vbcast.lane.b32.xlu0 %v918, %s939
      %v941 = vpop.permute.xlu0 %940
      %s943 = sor.u32 256, 48
      %944 = vbcast.lane.b32.xlu0 %v918, %s943
      %v945 = vpop.permute.xlu0 %944
      %s947 = sor.u32 256, 56
      %948 = vbcast.lane.b32.xlu0 %v918, %s947
      %v949 = vpop.permute.xlu0 %948
      %s951 = sor.u32 256, 64
      %952 = vbcast.lane.b32.xlu0 %v918, %s951
      %v953 = vpop.permute.xlu0 %952
      %s955 = sor.u32 256, 72
      %956 = vbcast.lane.b32.xlu0 %v918, %s955
      %v957 = vpop.permute.xlu0 %956
      %s959 = sor.u32 256, 80
      %960 = vbcast.lane.b32.xlu0 %v918, %s959
      %v961 = vpop.permute.xlu0 %960
      %s963 = sor.u32 256, 88
      %964 = vbcast.lane.b32.xlu0 %v918, %s963
      %v965 = vpop.permute.xlu0 %964
      %s967 = sor.u32 256, 96
      %968 = vbcast.lane.b32.xlu0 %v918, %s967
      %v969 = vpop.permute.xlu0 %968
      %s971 = sor.u32 256, 104
      %972 = vbcast.lane.b32.xlu0 %v918, %s971
      %v973 = vpop.permute.xlu0 %972
      %s975 = sor.u32 256, 112
      %976 = vbcast.lane.b32.xlu0 %v918, %s975
      %v977 = vpop.permute.xlu0 %976
      %s979 = sor.u32 256, 120
      %980 = vbcast.lane.b32.xlu0 %v918, %s979
      %v981 = vpop.permute.xlu0 %980
      %v982 = vlaneseq
      %v983 = vshrl.u32 %v982, 7
      %v984 = vsub.s32 7, %v983
      %v985 = vrot.slane %v426, %v984
      %987 = vbcast.lane.b32.xlu0 %v985, 256
      %v988 = vpop.permute.xlu0 %987
      %s990 = sor.u32 256, 8
      %991 = vbcast.lane.b32.xlu0 %v985, %s990
      %v992 = vpop.permute.xlu0 %991
      %s994 = sor.u32 256, 16
      %995 = vbcast.lane.b32.xlu0 %v985, %s994
      %v996 = vpop.permute.xlu0 %995
      %s998 = sor.u32 256, 24
      %999 = vbcast.lane.b32.xlu0 %v985, %s998
      %v1000 = vpop.permute.xlu0 %999
      %s1002 = sor.u32 256, 32
      %1003 = vbcast.lane.b32.xlu0 %v985, %s1002
      %v1004 = vpop.permute.xlu0 %1003
      %s1006 = sor.u32 256, 40
      %1007 = vbcast.lane.b32.xlu0 %v985, %s1006
      %v1008 = vpop.permute.xlu0 %1007
      %s1010 = sor.u32 256, 48
      %1011 = vbcast.lane.b32.xlu0 %v985, %s1010
      %v1012 = vpop.permute.xlu0 %1011
      %s1014 = sor.u32 256, 56
      %1015 = vbcast.lane.b32.xlu0 %v985, %s1014
      %v1016 = vpop.permute.xlu0 %1015
      %s1018 = sor.u32 256, 64
      %1019 = vbcast.lane.b32.xlu0 %v985, %s1018
      %v1020 = vpop.permute.xlu0 %1019
      %s1022 = sor.u32 256, 72
      %1023 = vbcast.lane.b32.xlu0 %v985, %s1022
      %v1024 = vpop.permute.xlu0 %1023
      %s1026 = sor.u32 256, 80
      %1027 = vbcast.lane.b32.xlu0 %v985, %s1026
      %v1028 = vpop.permute.xlu0 %1027
      %s1030 = sor.u32 256, 88
      %1031 = vbcast.lane.b32.xlu0 %v985, %s1030
      %v1032 = vpop.permute.xlu0 %1031
      %s1034 = sor.u32 256, 96
      %1035 = vbcast.lane.b32.xlu0 %v985, %s1034
      %v1036 = vpop.permute.xlu0 %1035
      %s1038 = sor.u32 256, 104
      %1039 = vbcast.lane.b32.xlu0 %v985, %s1038
      %v1040 = vpop.permute.xlu0 %1039
      %s1042 = sor.u32 256, 112
      %1043 = vbcast.lane.b32.xlu0 %v985, %s1042
      %v1044 = vpop.permute.xlu0 %1043
      %s1046 = sor.u32 256, 120
      %1047 = vbcast.lane.b32.xlu0 %v985, %s1046
      %v1048 = vpop.permute.xlu0 %1047
      %v1049 = vadd.f32 %v519, %v174
      %v1050 = vadd.f32 %v523, %v175
      %v1051 = vadd.f32 %v527, %v176
      %v1052 = vadd.f32 %v531, %v177
      %v1053 = vadd.f32 %v535, %v178
      %v1054 = vadd.f32 %v539, %v179
      %v1055 = vadd.f32 %v543, %v180
      %v1056 = vadd.f32 %v547, %v181
      %v1057 = vadd.f32 %v551, %v182
      %v1058 = vadd.f32 %v555, %v183
      %v1059 = vadd.f32 %v559, %v184
      %v1060 = vadd.f32 %v563, %v185
      %v1061 = vadd.f32 %v567, %v186
      %v1062 = vadd.f32 %v571, %v187
      %v1063 = vadd.f32 %v575, %v188
      %v1064 = vadd.f32 %v579, %v189
      %v1065 = vadd.f32 %v586, %v174
      %v1066 = vadd.f32 %v590, %v175
      %v1067 = vadd.f32 %v594, %v176
      %v1068 = vadd.f32 %v598, %v177
      %v1069 = vadd.f32 %v602, %v178
      %v1070 = vadd.f32 %v606, %v179
      %v1071 = vadd.f32 %v610, %v180
      %v1072 = vadd.f32 %v614, %v181
      %v1073 = vadd.f32 %v618, %v182
      %v1074 = vadd.f32 %v622, %v183
      %v1075 = vadd.f32 %v626, %v184
      %v1076 = vadd.f32 %v630, %v185
      %v1077 = vadd.f32 %v634, %v186
      %v1078 = vadd.f32 %v638, %v187
      %v1079 = vadd.f32 %v642, %v188
      %v1080 = vadd.f32 %v646, %v189
      %v1081 = vadd.f32 %v653, %v174
      %v1082 = vadd.f32 %v657, %v175
      %v1083 = vadd.f32 %v661, %v176
      %v1084 = vadd.f32 %v665, %v177
      %v1085 = vadd.f32 %v669, %v178
      %v1086 = vadd.f32 %v673, %v179
      %v1087 = vadd.f32 %v677, %v180
      %v1088 = vadd.f32 %v681, %v181
      %v1089 = vadd.f32 %v685, %v182
      %v1090 = vadd.f32 %v689, %v183
      %v1091 = vadd.f32 %v693, %v184
      %v1092 = vadd.f32 %v697, %v185
      %v1093 = vadd.f32 %v701, %v186
      %v1094 = vadd.f32 %v705, %v187
      %v1095 = vadd.f32 %v709, %v188
      %v1096 = vadd.f32 %v713, %v189
      %v1097 = vadd.f32 %v720, %v174
      %v1098 = vadd.f32 %v724, %v175
      %v1099 = vadd.f32 %v728, %v176
      %v1100 = vadd.f32 %v732, %v177
      %v1101 = vadd.f32 %v736, %v178
      %v1102 = vadd.f32 %v740, %v179
      %v1103 = vadd.f32 %v744, %v180
      %v1104 = vadd.f32 %v748, %v181
      %v1105 = vadd.f32 %v752, %v182
      %v1106 = vadd.f32 %v756, %v183
      %v1107 = vadd.f32 %v760, %v184
      %v1108 = vadd.f32 %v764, %v185
      %v1109 = vadd.f32 %v768, %v186
      %v1110 = vadd.f32 %v772, %v187
      %v1111 = vadd.f32 %v776, %v188
      %v1112 = vadd.f32 %v780, %v189
      %v1113 = vadd.f32 %v787, %v174
      %v1114 = vadd.f32 %v791, %v175
      %v1115 = vadd.f32 %v795, %v176
      %v1116 = vadd.f32 %v799, %v177
      %v1117 = vadd.f32 %v803, %v178
      %v1118 = vadd.f32 %v807, %v179
      %v1119 = vadd.f32 %v811, %v180
      %v1120 = vadd.f32 %v815, %v181
      %v1121 = vadd.f32 %v819, %v182
      %v1122 = vadd.f32 %v823, %v183
      %v1123 = vadd.f32 %v827, %v184
      %v1124 = vadd.f32 %v831, %v185
      %v1125 = vadd.f32 %v835, %v186
      %v1126 = vadd.f32 %v839, %v187
      %v1127 = vadd.f32 %v843, %v188
      %v1128 = vadd.f32 %v847, %v189
      %v1129 = vadd.f32 %v854, %v174
      %v1130 = vadd.f32 %v858, %v175
      %v1131 = vadd.f32 %v862, %v176
      %v1132 = vadd.f32 %v866, %v177
      %v1133 = vadd.f32 %v870, %v178
      %v1134 = vadd.f32 %v874, %v179
      %v1135 = vadd.f32 %v878, %v180
      %v1136 = vadd.f32 %v882, %v181
      %v1137 = vadd.f32 %v886, %v182
      %v1138 = vadd.f32 %v890, %v183
      %v1139 = vadd.f32 %v894, %v184
      %v1140 = vadd.f32 %v898, %v185
      %v1141 = vadd.f32 %v902, %v186
      %v1142 = vadd.f32 %v906, %v187
      %v1143 = vadd.f32 %v910, %v188
      %v1144 = vadd.f32 %v914, %v189
      %v1145 = vadd.f32 %v921, %v174
      %v1146 = vadd.f32 %v925, %v175
      %v1147 = vadd.f32 %v929, %v176
      %v1148 = vadd.f32 %v933, %v177
      %v1149 = vadd.f32 %v937, %v178
      %v1150 = vadd.f32 %v941, %v179
      %v1151 = vadd.f32 %v945, %v180
      %v1152 = vadd.f32 %v949, %v181
      %v1153 = vadd.f32 %v953, %v182
      %v1154 = vadd.f32 %v957, %v183
      %v1155 = vadd.f32 %v961, %v184
      %v1156 = vadd.f32 %v965, %v185
      %v1157 = vadd.f32 %v969, %v186
      %v1158 = vadd.f32 %v973, %v187
      %v1159 = vadd.f32 %v977, %v188
      %v1160 = vadd.f32 %v981, %v189
      %v1161 = vadd.f32 %v988, %v174
      %v1162 = vadd.f32 %v992, %v175
      %v1163 = vadd.f32 %v996, %v176
      %v1164 = vadd.f32 %v1000, %v177
      %v1165 = vadd.f32 %v1004, %v178
      %v1166 = vadd.f32 %v1008, %v179
      %v1167 = vadd.f32 %v1012, %v180
      %v1168 = vadd.f32 %v1016, %v181
      %v1169 = vadd.f32 %v1020, %v182
      %v1170 = vadd.f32 %v1024, %v183
      %v1171 = vadd.f32 %v1028, %v184
      %v1172 = vadd.f32 %v1032, %v185
      %v1173 = vadd.f32 %v1036, %v186
      %v1174 = vadd.f32 %v1040, %v187
      %v1175 = vadd.f32 %v1044, %v188
      %v1176 = vadd.f32 %v1048, %v189
      %v1177 = vmax.f32 %v1049, %v1050
      %v1178 = vmax.f32 %v1177, %v1051
      %v1179 = vmax.f32 %v1178, %v1052
      %v1180 = vmax.f32 %v1179, %v1053
      %v1181 = vmax.f32 %v1180, %v1054
      %v1182 = vmax.f32 %v1181, %v1055
      %v1183 = vmax.f32 %v1182, %v1056
      %v1184 = vmax.f32 %v1183, %v1057
      %v1185 = vmax.f32 %v1184, %v1058
      %v1186 = vmax.f32 %v1185, %v1059
      %v1187 = vmax.f32 %v1186, %v1060
      %v1188 = vmax.f32 %v1187, %v1061
      %v1189 = vmax.f32 %v1188, %v1062
      %v1190 = vmax.f32 %v1189, %v1063
      %v1191 = vmax.f32 %v1190, %v1064
      %v1192 = vrot.slane %v1191, 4
      %v1193 = vmax.f32 %v1191, %v1192
      %v1194 = vrot.slane %v1193, 2
      %v1195 = vmax.f32 %v1193, %v1194
      %v1196 = vrot.slane %v1195, 1
      %v1197 = vmax.f32 %v1195, %v1196
      %v1198 = vmax.f32 %v1065, %v1066
      %v1199 = vmax.f32 %v1198, %v1067
      %v1200 = vmax.f32 %v1199, %v1068
      %v1201 = vmax.f32 %v1200, %v1069
      %v1202 = vmax.f32 %v1201, %v1070
      %v1203 = vmax.f32 %v1202, %v1071
      %v1204 = vmax.f32 %v1203, %v1072
      %v1205 = vmax.f32 %v1204, %v1073
      %v1206 = vmax.f32 %v1205, %v1074
      %v1207 = vmax.f32 %v1206, %v1075
      %v1208 = vmax.f32 %v1207, %v1076
      %v1209 = vmax.f32 %v1208, %v1077
      %v1210 = vmax.f32 %v1209, %v1078
      %v1211 = vmax.f32 %v1210, %v1079
      %v1212 = vmax.f32 %v1211, %v1080
      %v1213 = vrot.slane %v1212, 4
      %v1214 = vmax.f32 %v1212, %v1213
      %v1215 = vrot.slane %v1214, 2
      %v1216 = vmax.f32 %v1214, %v1215
      %v1217 = vrot.slane %v1216, 1
      %v1218 = vmax.f32 %v1216, %v1217
      %v1219 = vmax.f32 %v1081, %v1082
      %v1220 = vmax.f32 %v1219, %v1083
      %v1221 = vmax.f32 %v1220, %v1084
      %v1222 = vmax.f32 %v1221, %v1085
      %v1223 = vmax.f32 %v1222, %v1086
      %v1224 = vmax.f32 %v1223, %v1087
      %v1225 = vmax.f32 %v1224, %v1088
      %v1226 = vmax.f32 %v1225, %v1089
      %v1227 = vmax.f32 %v1226, %v1090
      %v1228 = vmax.f32 %v1227, %v1091
      %v1229 = vmax.f32 %v1228, %v1092
      %v1230 = vmax.f32 %v1229, %v1093
      %v1231 = vmax.f32 %v1230, %v1094
      %v1232 = vmax.f32 %v1231, %v1095
      %v1233 = vmax.f32 %v1232, %v1096
      %v1234 = vrot.slane %v1233, 4
      %v1235 = vmax.f32 %v1233, %v1234
      %v1236 = vrot.slane %v1235, 2
      %v1237 = vmax.f32 %v1235, %v1236
      %v1238 = vrot.slane %v1237, 1
      %v1239 = vmax.f32 %v1237, %v1238
      %v1240 = vmax.f32 %v1097, %v1098
      %v1241 = vmax.f32 %v1240, %v1099
      %v1242 = vmax.f32 %v1241, %v1100
      %v1243 = vmax.f32 %v1242, %v1101
      %v1244 = vmax.f32 %v1243, %v1102
      %v1245 = vmax.f32 %v1244, %v1103
      %v1246 = vmax.f32 %v1245, %v1104
      %v1247 = vmax.f32 %v1246, %v1105
      %v1248 = vmax.f32 %v1247, %v1106
      %v1249 = vmax.f32 %v1248, %v1107
      %v1250 = vmax.f32 %v1249, %v1108
      %v1251 = vmax.f32 %v1250, %v1109
      %v1252 = vmax.f32 %v1251, %v1110
      %v1253 = vmax.f32 %v1252, %v1111
      %v1254 = vmax.f32 %v1253, %v1112
      %v1255 = vrot.slane %v1254, 4
      %v1256 = vmax.f32 %v1254, %v1255
      %v1257 = vrot.slane %v1256, 2
      %v1258 = vmax.f32 %v1256, %v1257
      %v1259 = vrot.slane %v1258, 1
      %v1260 = vmax.f32 %v1258, %v1259
      %v1261 = vmax.f32 %v1113, %v1114
      %v1262 = vmax.f32 %v1261, %v1115
      %v1263 = vmax.f32 %v1262, %v1116
      %v1264 = vmax.f32 %v1263, %v1117
      %v1265 = vmax.f32 %v1264, %v1118
      %v1266 = vmax.f32 %v1265, %v1119
      %v1267 = vmax.f32 %v1266, %v1120
      %v1268 = vmax.f32 %v1267, %v1121
      %v1269 = vmax.f32 %v1268, %v1122
      %v1270 = vmax.f32 %v1269, %v1123
      %v1271 = vmax.f32 %v1270, %v1124
      %v1272 = vmax.f32 %v1271, %v1125
      %v1273 = vmax.f32 %v1272, %v1126
      %v1274 = vmax.f32 %v1273, %v1127
      %v1275 = vmax.f32 %v1274, %v1128
      %v1276 = vrot.slane %v1275, 4
      %v1277 = vmax.f32 %v1275, %v1276
      %v1278 = vrot.slane %v1277, 2
      %v1279 = vmax.f32 %v1277, %v1278
      %v1280 = vrot.slane %v1279, 1
      %v1281 = vmax.f32 %v1279, %v1280
      %v1282 = vmax.f32 %v1129, %v1130
      %v1283 = vmax.f32 %v1282, %v1131
      %v1284 = vmax.f32 %v1283, %v1132
      %v1285 = vmax.f32 %v1284, %v1133
      %v1286 = vmax.f32 %v1285, %v1134
      %v1287 = vmax.f32 %v1286, %v1135
      %v1288 = vmax.f32 %v1287, %v1136
      %v1289 = vmax.f32 %v1288, %v1137
      %v1290 = vmax.f32 %v1289, %v1138
      %v1291 = vmax.f32 %v1290, %v1139
      %v1292 = vmax.f32 %v1291, %v1140
      %v1293 = vmax.f32 %v1292, %v1141
      %v1294 = vmax.f32 %v1293, %v1142
      %v1295 = vmax.f32 %v1294, %v1143
      %v1296 = vmax.f32 %v1295, %v1144
      %v1297 = vrot.slane %v1296, 4
      %v1298 = vmax.f32 %v1296, %v1297
      %v1299 = vrot.slane %v1298, 2
      %v1300 = vmax.f32 %v1298, %v1299
      %v1301 = vrot.slane %v1300, 1
      %v1302 = vmax.f32 %v1300, %v1301
      %v1303 = vmax.f32 %v1145, %v1146
      %v1304 = vmax.f32 %v1303, %v1147
      %v1305 = vmax.f32 %v1304, %v1148
      %v1306 = vmax.f32 %v1305, %v1149
      %v1307 = vmax.f32 %v1306, %v1150
      %v1308 = vmax.f32 %v1307, %v1151
      %v1309 = vmax.f32 %v1308, %v1152
      %v1310 = vmax.f32 %v1309, %v1153
      %v1311 = vmax.f32 %v1310, %v1154
      %v1312 = vmax.f32 %v1311, %v1155
      %v1313 = vmax.f32 %v1312, %v1156
      %v1314 = vmax.f32 %v1313, %v1157
      %v1315 = vmax.f32 %v1314, %v1158
      %v1316 = vmax.f32 %v1315, %v1159
      %v1317 = vmax.f32 %v1316, %v1160
      %v1318 = vrot.slane %v1317, 4
      %v1319 = vmax.f32 %v1317, %v1318
      %v1320 = vrot.slane %v1319, 2
      %v1321 = vmax.f32 %v1319, %v1320
      %v1322 = vrot.slane %v1321, 1
      %v1323 = vmax.f32 %v1321, %v1322
      %v1324 = vmax.f32 %v1161, %v1162
      %v1325 = vmax.f32 %v1324, %v1163
      %v1326 = vmax.f32 %v1325, %v1164
      %v1327 = vmax.f32 %v1326, %v1165
      %v1328 = vmax.f32 %v1327, %v1166
      %v1329 = vmax.f32 %v1328, %v1167
      %v1330 = vmax.f32 %v1329, %v1168
      %v1331 = vmax.f32 %v1330, %v1169
      %v1332 = vmax.f32 %v1331, %v1170
      %v1333 = vmax.f32 %v1332, %v1171
      %v1334 = vmax.f32 %v1333, %v1172
      %v1335 = vmax.f32 %v1334, %v1173
      %v1336 = vmax.f32 %v1335, %v1174
      %v1337 = vmax.f32 %v1336, %v1175
      %v1338 = vmax.f32 %v1337, %v1176
      %v1339 = vrot.slane %v1338, 4
      %v1340 = vmax.f32 %v1338, %v1339
      %v1341 = vrot.slane %v1340, 2
      %v1342 = vmax.f32 %v1340, %v1341
      %v1343 = vrot.slane %v1342, 1
      %v1344 = vmax.f32 %v1342, %v1343
      %v1346 = vrot.slane %v429, 1
      %v1347 = vrot.slane %v429, 2
      %v1348 = vrot.slane %v429, 3
      %v1349 = vrot.slane %v429, 4
      %v1350 = vrot.slane %v429, 5
      %v1351 = vrot.slane %v429, 6
      %v1352 = vrot.slane %v429, 7
      %v1361 = vadd.f32 %v1197, %v429
      %v1362 = vadd.f32 %v1218, %v1346
      %v1363 = vadd.f32 %v1239, %v1347
      %v1364 = vadd.f32 %v1260, %v1348
      %v1365 = vadd.f32 %v1281, %v1349
      %v1366 = vadd.f32 %v1302, %v1350
      %v1367 = vadd.f32 %v1323, %v1351
      %v1368 = vadd.f32 %v1344, %v1352
      %vm1369 = vcmp.ge.f32.partialorder %v1049, %v1197
      %vm1370 = vcmp.ge.f32.partialorder %v1050, %v1197
      %vm1371 = vcmp.ge.f32.partialorder %v1051, %v1197
      %vm1372 = vcmp.ge.f32.partialorder %v1052, %v1197
      %vm1373 = vcmp.ge.f32.partialorder %v1053, %v1197
      %vm1374 = vcmp.ge.f32.partialorder %v1054, %v1197
      %vm1375 = vcmp.ge.f32.partialorder %v1055, %v1197
      %vm1376 = vcmp.ge.f32.partialorder %v1056, %v1197
      %vm1377 = vcmp.ge.f32.partialorder %v1057, %v1197
      %vm1378 = vcmp.ge.f32.partialorder %v1058, %v1197
      %vm1379 = vcmp.ge.f32.partialorder %v1059, %v1197
      %vm1380 = vcmp.ge.f32.partialorder %v1060, %v1197
      %vm1381 = vcmp.ge.f32.partialorder %v1061, %v1197
      %vm1382 = vcmp.ge.f32.partialorder %v1062, %v1197
      %vm1383 = vcmp.ge.f32.partialorder %v1063, %v1197
      %vm1384 = vcmp.ge.f32.partialorder %v1064, %v1197
      %vm1385 = vcmp.ge.f32.partialorder %v1065, %v1218
      %vm1386 = vcmp.ge.f32.partialorder %v1066, %v1218
      %vm1387 = vcmp.ge.f32.partialorder %v1067, %v1218
      %vm1388 = vcmp.ge.f32.partialorder %v1068, %v1218
      %vm1389 = vcmp.ge.f32.partialorder %v1069, %v1218
      %vm1390 = vcmp.ge.f32.partialorder %v1070, %v1218
      %vm1391 = vcmp.ge.f32.partialorder %v1071, %v1218
      %vm1392 = vcmp.ge.f32.partialorder %v1072, %v1218
      %vm1393 = vcmp.ge.f32.partialorder %v1073, %v1218
      %vm1394 = vcmp.ge.f32.partialorder %v1074, %v1218
      %vm1395 = vcmp.ge.f32.partialorder %v1075, %v1218
      %vm1396 = vcmp.ge.f32.partialorder %v1076, %v1218
      %vm1397 = vcmp.ge.f32.partialorder %v1077, %v1218
      %vm1398 = vcmp.ge.f32.partialorder %v1078, %v1218
      %vm1399 = vcmp.ge.f32.partialorder %v1079, %v1218
      %vm1400 = vcmp.ge.f32.partialorder %v1080, %v1218
      %vm1401 = vcmp.ge.f32.partialorder %v1081, %v1239
      %vm1402 = vcmp.ge.f32.partialorder %v1082, %v1239
      %vm1403 = vcmp.ge.f32.partialorder %v1083, %v1239
      %vm1404 = vcmp.ge.f32.partialorder %v1084, %v1239
      %vm1405 = vcmp.ge.f32.partialorder %v1085, %v1239
      %vm1406 = vcmp.ge.f32.partialorder %v1086, %v1239
      %vm1407 = vcmp.ge.f32.partialorder %v1087, %v1239
      %vm1408 = vcmp.ge.f32.partialorder %v1088, %v1239
      %vm1409 = vcmp.ge.f32.partialorder %v1089, %v1239
      %vm1410 = vcmp.ge.f32.partialorder %v1090, %v1239
      %vm1411 = vcmp.ge.f32.partialorder %v1091, %v1239
      %vm1412 = vcmp.ge.f32.partialorder %v1092, %v1239
      %vm1413 = vcmp.ge.f32.partialorder %v1093, %v1239
      %vm1414 = vcmp.ge.f32.partialorder %v1094, %v1239
      %vm1415 = vcmp.ge.f32.partialorder %v1095, %v1239
      %vm1416 = vcmp.ge.f32.partialorder %v1096, %v1239
      %vm1417 = vcmp.ge.f32.partialorder %v1097, %v1260
      %vm1418 = vcmp.ge.f32.partialorder %v1098, %v1260
      %vm1419 = vcmp.ge.f32.partialorder %v1099, %v1260
      %vm1420 = vcmp.ge.f32.partialorder %v1100, %v1260
      %vm1421 = vcmp.ge.f32.partialorder %v1101, %v1260
      %vm1422 = vcmp.ge.f32.partialorder %v1102, %v1260
      %vm1423 = vcmp.ge.f32.partialorder %v1103, %v1260
      %vm1424 = vcmp.ge.f32.partialorder %v1104, %v1260
      %vm1425 = vcmp.ge.f32.partialorder %v1105, %v1260
      %vm1426 = vcmp.ge.f32.partialorder %v1106, %v1260
      %vm1427 = vcmp.ge.f32.partialorder %v1107, %v1260
      %vm1428 = vcmp.ge.f32.partialorder %v1108, %v1260
      %vm1429 = vcmp.ge.f32.partialorder %v1109, %v1260
      %vm1430 = vcmp.ge.f32.partialorder %v1110, %v1260
      %vm1431 = vcmp.ge.f32.partialorder %v1111, %v1260
      %vm1432 = vcmp.ge.f32.partialorder %v1112, %v1260
      %vm1433 = vcmp.ge.f32.partialorder %v1113, %v1281
      %vm1434 = vcmp.ge.f32.partialorder %v1114, %v1281
      %vm1435 = vcmp.ge.f32.partialorder %v1115, %v1281
      %vm1436 = vcmp.ge.f32.partialorder %v1116, %v1281
      %vm1437 = vcmp.ge.f32.partialorder %v1117, %v1281
      %vm1438 = vcmp.ge.f32.partialorder %v1118, %v1281
      %vm1439 = vcmp.ge.f32.partialorder %v1119, %v1281
      %vm1440 = vcmp.ge.f32.partialorder %v1120, %v1281
      %vm1441 = vcmp.ge.f32.partialorder %v1121, %v1281
      %vm1442 = vcmp.ge.f32.partialorder %v1122, %v1281
      %vm1443 = vcmp.ge.f32.partialorder %v1123, %v1281
      %vm1444 = vcmp.ge.f32.partialorder %v1124, %v1281
      %vm1445 = vcmp.ge.f32.partialorder %v1125, %v1281
      %vm1446 = vcmp.ge.f32.partialorder %v1126, %v1281
      %vm1447 = vcmp.ge.f32.partialorder %v1127, %v1281
      %vm1448 = vcmp.ge.f32.partialorder %v1128, %v1281
      %vm1449 = vcmp.ge.f32.partialorder %v1129, %v1302
      %vm1450 = vcmp.ge.f32.partialorder %v1130, %v1302
      %vm1451 = vcmp.ge.f32.partialorder %v1131, %v1302
      %vm1452 = vcmp.ge.f32.partialorder %v1132, %v1302
      %vm1453 = vcmp.ge.f32.partialorder %v1133, %v1302
      %vm1454 = vcmp.ge.f32.partialorder %v1134, %v1302
      %vm1455 = vcmp.ge.f32.partialorder %v1135, %v1302
      %vm1456 = vcmp.ge.f32.partialorder %v1136, %v1302
      %vm1457 = vcmp.ge.f32.partialorder %v1137, %v1302
      %vm1458 = vcmp.ge.f32.partialorder %v1138, %v1302
      %vm1459 = vcmp.ge.f32.partialorder %v1139, %v1302
      %vm1460 = vcmp.ge.f32.partialorder %v1140, %v1302
      %vm1461 = vcmp.ge.f32.partialorder %v1141, %v1302
      %vm1462 = vcmp.ge.f32.partialorder %v1142, %v1302
      %vm1463 = vcmp.ge.f32.partialorder %v1143, %v1302
      %vm1464 = vcmp.ge.f32.partialorder %v1144, %v1302
      %vm1465 = vcmp.ge.f32.partialorder %v1145, %v1323
      %vm1466 = vcmp.ge.f32.partialorder %v1146, %v1323
      %vm1467 = vcmp.ge.f32.partialorder %v1147, %v1323
      %vm1468 = vcmp.ge.f32.partialorder %v1148, %v1323
      %vm1469 = vcmp.ge.f32.partialorder %v1149, %v1323
      %vm1470 = vcmp.ge.f32.partialorder %v1150, %v1323
      %vm1471 = vcmp.ge.f32.partialorder %v1151, %v1323
      %vm1472 = vcmp.ge.f32.partialorder %v1152, %v1323
      %vm1473 = vcmp.ge.f32.partialorder %v1153, %v1323
      %vm1474 = vcmp.ge.f32.partialorder %v1154, %v1323
      %vm1475 = vcmp.ge.f32.partialorder %v1155, %v1323
      %vm1476 = vcmp.ge.f32.partialorder %v1156, %v1323
      %vm1477 = vcmp.ge.f32.partialorder %v1157, %v1323
      %vm1478 = vcmp.ge.f32.partialorder %v1158, %v1323
      %vm1479 = vcmp.ge.f32.partialorder %v1159, %v1323
      %vm1480 = vcmp.ge.f32.partialorder %v1160, %v1323
      %vm1481 = vcmp.ge.f32.partialorder %v1161, %v1344
      %vm1482 = vcmp.ge.f32.partialorder %v1162, %v1344
      %vm1483 = vcmp.ge.f32.partialorder %v1163, %v1344
      %vm1484 = vcmp.ge.f32.partialorder %v1164, %v1344
      %vm1485 = vcmp.ge.f32.partialorder %v1165, %v1344
      %vm1486 = vcmp.ge.f32.partialorder %v1166, %v1344
      %vm1487 = vcmp.ge.f32.partialorder %v1167, %v1344
      %vm1488 = vcmp.ge.f32.partialorder %v1168, %v1344
      %vm1489 = vcmp.ge.f32.partialorder %v1169, %v1344
      %vm1490 = vcmp.ge.f32.partialorder %v1170, %v1344
      %vm1491 = vcmp.ge.f32.partialorder %v1171, %v1344
      %vm1492 = vcmp.ge.f32.partialorder %v1172, %v1344
      %vm1493 = vcmp.ge.f32.partialorder %v1173, %v1344
      %vm1494 = vcmp.ge.f32.partialorder %v1174, %v1344
      %vm1495 = vcmp.ge.f32.partialorder %v1175, %v1344
      %vm1496 = vcmp.ge.f32.partialorder %v1176, %v1344
      %v1497 = vsel %vm1369, %v261, 128
      %v1498 = vsel %vm1370, %v262, 128
      %v1499 = vsel %vm1371, %v263, 128
      %v1500 = vsel %vm1372, %v264, 128
      %v1501 = vsel %vm1373, %v265, 128
      %v1502 = vsel %vm1374, %v266, 128
      %v1503 = vsel %vm1375, %v267, 128
      %v1504 = vsel %vm1376, %v268, 128
      %v1505 = vsel %vm1377, %v269, 128
      %v1506 = vsel %vm1378, %v270, 128
      %v1507 = vsel %vm1379, %v271, 128
      %v1508 = vsel %vm1380, %v272, 128
      %v1509 = vsel %vm1381, %v273, 128
      %v1510 = vsel %vm1382, %v274, 128
      %v1511 = vsel %vm1383, %v275, 128
      %v1512 = vsel %vm1384, %v276, 128
      %v1513 = vsel %vm1385, %v261, 128
      %v1514 = vsel %vm1386, %v262, 128
      %v1515 = vsel %vm1387, %v263, 128
      %v1516 = vsel %vm1388, %v264, 128
      %v1517 = vsel %vm1389, %v265, 128
      %v1518 = vsel %vm1390, %v266, 128
      %v1519 = vsel %vm1391, %v267, 128
      %v1520 = vsel %vm1392, %v268, 128
      %v1521 = vsel %vm1393, %v269, 128
      %v1522 = vsel %vm1394, %v270, 128
      %v1523 = vsel %vm1395, %v271, 128
      %v1524 = vsel %vm1396, %v272, 128
      %v1525 = vsel %vm1397, %v273, 128
      %v1526 = vsel %vm1398, %v274, 128
      %v1527 = vsel %vm1399, %v275, 128
      %v1528 = vsel %vm1400, %v276, 128
      %v1529 = vsel %vm1401, %v261, 128
      %v1530 = vsel %vm1402, %v262, 128
      %v1531 = vsel %vm1403, %v263, 128
      %v1532 = vsel %vm1404, %v264, 128
      %v1533 = vsel %vm1405, %v265, 128
      %v1534 = vsel %vm1406, %v266, 128
      %v1535 = vsel %vm1407, %v267, 128
      %v1536 = vsel %vm1408, %v268, 128
      %v1537 = vsel %vm1409, %v269, 128
      %v1538 = vsel %vm1410, %v270, 128
      %v1539 = vsel %vm1411, %v271, 128
      %v1540 = vsel %vm1412, %v272, 128
      %v1541 = vsel %vm1413, %v273, 128
      %v1542 = vsel %vm1414, %v274, 128
      %v1543 = vsel %vm1415, %v275, 128
      %v1544 = vsel %vm1416, %v276, 128
      %v1545 = vsel %vm1417, %v261, 128
      %v1546 = vsel %vm1418, %v262, 128
      %v1547 = vsel %vm1419, %v263, 128
      %v1548 = vsel %vm1420, %v264, 128
      %v1549 = vsel %vm1421, %v265, 128
      %v1550 = vsel %vm1422, %v266, 128
      %v1551 = vsel %vm1423, %v267, 128
      %v1552 = vsel %vm1424, %v268, 128
      %v1553 = vsel %vm1425, %v269, 128
      %v1554 = vsel %vm1426, %v270, 128
      %v1555 = vsel %vm1427, %v271, 128
      %v1556 = vsel %vm1428, %v272, 128
      %v1557 = vsel %vm1429, %v273, 128
      %v1558 = vsel %vm1430, %v274, 128
      %v1559 = vsel %vm1431, %v275, 128
      %v1560 = vsel %vm1432, %v276, 128
      %v1561 = vsel %vm1433, %v261, 128
      %v1562 = vsel %vm1434, %v262, 128
      %v1563 = vsel %vm1435, %v263, 128
      %v1564 = vsel %vm1436, %v264, 128
      %v1565 = vsel %vm1437, %v265, 128
      %v1566 = vsel %vm1438, %v266, 128
      %v1567 = vsel %vm1439, %v267, 128
      %v1568 = vsel %vm1440, %v268, 128
      %v1569 = vsel %vm1441, %v269, 128
      %v1570 = vsel %vm1442, %v270, 128
      %v1571 = vsel %vm1443, %v271, 128
      %v1572 = vsel %vm1444, %v272, 128
      %v1573 = vsel %vm1445, %v273, 128
      %v1574 = vsel %vm1446, %v274, 128
      %v1575 = vsel %vm1447, %v275, 128
      %v1576 = vsel %vm1448, %v276, 128
      %v1577 = vsel %vm1449, %v261, 128
      %v1578 = vsel %vm1450, %v262, 128
      %v1579 = vsel %vm1451, %v263, 128
      %v1580 = vsel %vm1452, %v264, 128
      %v1581 = vsel %vm1453, %v265, 128
      %v1582 = vsel %vm1454, %v266, 128
      %v1583 = vsel %vm1455, %v267, 128
      %v1584 = vsel %vm1456, %v268, 128
      %v1585 = vsel %vm1457, %v269, 128
      %v1586 = vsel %vm1458, %v270, 128
      %v1587 = vsel %vm1459, %v271, 128
      %v1588 = vsel %vm1460, %v272, 128
      %v1589 = vsel %vm1461, %v273, 128
      %v1590 = vsel %vm1462, %v274, 128
      %v1591 = vsel %vm1463, %v275, 128
      %v1592 = vsel %vm1464, %v276, 128
      %v1593 = vsel %vm1465, %v261, 128
      %v1594 = vsel %vm1466, %v262, 128
      %v1595 = vsel %vm1467, %v263, 128
      %v1596 = vsel %vm1468, %v264, 128
      %v1597 = vsel %vm1469, %v265, 128
      %v1598 = vsel %vm1470, %v266, 128
      %v1599 = vsel %vm1471, %v267, 128
      %v1600 = vsel %vm1472, %v268, 128
      %v1601 = vsel %vm1473, %v269, 128
      %v1602 = vsel %vm1474, %v270, 128
      %v1603 = vsel %vm1475, %v271, 128
      %v1604 = vsel %vm1476, %v272, 128
      %v1605 = vsel %vm1477, %v273, 128
      %v1606 = vsel %vm1478, %v274, 128
      %v1607 = vsel %vm1479, %v275, 128
      %v1608 = vsel %vm1480, %v276, 128
      %v1609 = vsel %vm1481, %v261, 128
      %v1610 = vsel %vm1482, %v262, 128
      %v1611 = vsel %vm1483, %v263, 128
      %v1612 = vsel %vm1484, %v264, 128
      %v1613 = vsel %vm1485, %v265, 128
      %v1614 = vsel %vm1486, %v266, 128
      %v1615 = vsel %vm1487, %v267, 128
      %v1616 = vsel %vm1488, %v268, 128
      %v1617 = vsel %vm1489, %v269, 128
      %v1618 = vsel %vm1490, %v270, 128
      %v1619 = vsel %vm1491, %v271, 128
      %v1620 = vsel %vm1492, %v272, 128
      %v1621 = vsel %vm1493, %v273, 128
      %v1622 = vsel %vm1494, %v274, 128
      %v1623 = vsel %vm1495, %v275, 128
      %v1624 = vsel %vm1496, %v276, 128
      %vm1625 = vcmp.lt.s32.totalorder %v1497, %v1498
      %v1626 = vsel %vm1625, %v1497, %v1498
      %vm1627 = vcmp.lt.s32.totalorder %v1626, %v1499
      %v1628 = vsel %vm1627, %v1626, %v1499
      %vm1629 = vcmp.lt.s32.totalorder %v1628, %v1500
      %v1630 = vsel %vm1629, %v1628, %v1500
      %vm1631 = vcmp.lt.s32.totalorder %v1630, %v1501
      %v1632 = vsel %vm1631, %v1630, %v1501
      %vm1633 = vcmp.lt.s32.totalorder %v1632, %v1502
      %v1634 = vsel %vm1633, %v1632, %v1502
      %vm1635 = vcmp.lt.s32.totalorder %v1634, %v1503
      %v1636 = vsel %vm1635, %v1634, %v1503
      %vm1637 = vcmp.lt.s32.totalorder %v1636, %v1504
      %v1638 = vsel %vm1637, %v1636, %v1504
      %vm1639 = vcmp.lt.s32.totalorder %v1638, %v1505
      %v1640 = vsel %vm1639, %v1638, %v1505
      %vm1641 = vcmp.lt.s32.totalorder %v1640, %v1506
      %v1642 = vsel %vm1641, %v1640, %v1506
      %vm1643 = vcmp.lt.s32.totalorder %v1642, %v1507
      %v1644 = vsel %vm1643, %v1642, %v1507
      %vm1645 = vcmp.lt.s32.totalorder %v1644, %v1508
      %v1646 = vsel %vm1645, %v1644, %v1508
      %vm1647 = vcmp.lt.s32.totalorder %v1646, %v1509
      %v1648 = vsel %vm1647, %v1646, %v1509
      %vm1649 = vcmp.lt.s32.totalorder %v1648, %v1510
      %v1650 = vsel %vm1649, %v1648, %v1510
      %vm1651 = vcmp.lt.s32.totalorder %v1650, %v1511
      %v1652 = vsel %vm1651, %v1650, %v1511
      %vm1653 = vcmp.lt.s32.totalorder %v1652, %v1512
      %v1654 = vsel %vm1653, %v1652, %v1512
      %v1655 = vrot.slane %v1654, 4
      %vm1656 = vcmp.lt.s32.totalorder %v1654, %v1655
      %v1657 = vsel %vm1656, %v1654, %v1655
      %v1658 = vrot.slane %v1657, 2
      %vm1659 = vcmp.lt.s32.totalorder %v1657, %v1658
      %v1660 = vsel %vm1659, %v1657, %v1658
      %v1661 = vrot.slane %v1660, 1
      %vm1662 = vcmp.lt.s32.totalorder %v1660, %v1661
      %v1663 = vsel %vm1662, %v1660, %v1661
      %vm1664 = vcmp.lt.s32.totalorder %v1513, %v1514
      %v1665 = vsel %vm1664, %v1513, %v1514
      %vm1666 = vcmp.lt.s32.totalorder %v1665, %v1515
      %v1667 = vsel %vm1666, %v1665, %v1515
      %vm1668 = vcmp.lt.s32.totalorder %v1667, %v1516
      %v1669 = vsel %vm1668, %v1667, %v1516
      %vm1670 = vcmp.lt.s32.totalorder %v1669, %v1517
      %v1671 = vsel %vm1670, %v1669, %v1517
      %vm1672 = vcmp.lt.s32.totalorder %v1671, %v1518
      %v1673 = vsel %vm1672, %v1671, %v1518
      %vm1674 = vcmp.lt.s32.totalorder %v1673, %v1519
      %v1675 = vsel %vm1674, %v1673, %v1519
      %vm1676 = vcmp.lt.s32.totalorder %v1675, %v1520
      %v1677 = vsel %vm1676, %v1675, %v1520
      %vm1678 = vcmp.lt.s32.totalorder %v1677, %v1521
      %v1679 = vsel %vm1678, %v1677, %v1521
      %vm1680 = vcmp.lt.s32.totalorder %v1679, %v1522
      %v1681 = vsel %vm1680, %v1679, %v1522
      %vm1682 = vcmp.lt.s32.totalorder %v1681, %v1523
      %v1683 = vsel %vm1682, %v1681, %v1523
      %vm1684 = vcmp.lt.s32.totalorder %v1683, %v1524
      %v1685 = vsel %vm1684, %v1683, %v1524
      %vm1686 = vcmp.lt.s32.totalorder %v1685, %v1525
      %v1687 = vsel %vm1686, %v1685, %v1525
      %vm1688 = vcmp.lt.s32.totalorder %v1687, %v1526
      %v1689 = vsel %vm1688, %v1687, %v1526
      %vm1690 = vcmp.lt.s32.totalorder %v1689, %v1527
      %v1691 = vsel %vm1690, %v1689, %v1527
      %vm1692 = vcmp.lt.s32.totalorder %v1691, %v1528
      %v1693 = vsel %vm1692, %v1691, %v1528
      %v1694 = vrot.slane %v1693, 4
      %vm1695 = vcmp.lt.s32.totalorder %v1693, %v1694
      %v1696 = vsel %vm1695, %v1693, %v1694
      %v1697 = vrot.slane %v1696, 2
      %vm1698 = vcmp.lt.s32.totalorder %v1696, %v1697
      %v1699 = vsel %vm1698, %v1696, %v1697
      %v1700 = vrot.slane %v1699, 1
      %vm1701 = vcmp.lt.s32.totalorder %v1699, %v1700
      %v1702 = vsel %vm1701, %v1699, %v1700
      %vm1703 = vcmp.lt.s32.totalorder %v1529, %v1530
      %v1704 = vsel %vm1703, %v1529, %v1530
      %vm1705 = vcmp.lt.s32.totalorder %v1704, %v1531
      %v1706 = vsel %vm1705, %v1704, %v1531
      %vm1707 = vcmp.lt.s32.totalorder %v1706, %v1532
      %v1708 = vsel %vm1707, %v1706, %v1532
      %vm1709 = vcmp.lt.s32.totalorder %v1708, %v1533
      %v1710 = vsel %vm1709, %v1708, %v1533
      %vm1711 = vcmp.lt.s32.totalorder %v1710, %v1534
      %v1712 = vsel %vm1711, %v1710, %v1534
      %vm1713 = vcmp.lt.s32.totalorder %v1712, %v1535
      %v1714 = vsel %vm1713, %v1712, %v1535
      %vm1715 = vcmp.lt.s32.totalorder %v1714, %v1536
      %v1716 = vsel %vm1715, %v1714, %v1536
      %vm1717 = vcmp.lt.s32.totalorder %v1716, %v1537
      %v1718 = vsel %vm1717, %v1716, %v1537
      %vm1719 = vcmp.lt.s32.totalorder %v1718, %v1538
      %v1720 = vsel %vm1719, %v1718, %v1538
      %vm1721 = vcmp.lt.s32.totalorder %v1720, %v1539
      %v1722 = vsel %vm1721, %v1720, %v1539
      %vm1723 = vcmp.lt.s32.totalorder %v1722, %v1540
      %v1724 = vsel %vm1723, %v1722, %v1540
      %vm1725 = vcmp.lt.s32.totalorder %v1724, %v1541
      %v1726 = vsel %vm1725, %v1724, %v1541
      %vm1727 = vcmp.lt.s32.totalorder %v1726, %v1542
      %v1728 = vsel %vm1727, %v1726, %v1542
      %vm1729 = vcmp.lt.s32.totalorder %v1728, %v1543
      %v1730 = vsel %vm1729, %v1728, %v1543
      %vm1731 = vcmp.lt.s32.totalorder %v1730, %v1544
      %v1732 = vsel %vm1731, %v1730, %v1544
      %v1733 = vrot.slane %v1732, 4
      %vm1734 = vcmp.lt.s32.totalorder %v1732, %v1733
      %v1735 = vsel %vm1734, %v1732, %v1733
      %v1736 = vrot.slane %v1735, 2
      %vm1737 = vcmp.lt.s32.totalorder %v1735, %v1736
      %v1738 = vsel %vm1737, %v1735, %v1736
      %v1739 = vrot.slane %v1738, 1
      %vm1740 = vcmp.lt.s32.totalorder %v1738, %v1739
      %v1741 = vsel %vm1740, %v1738, %v1739
      %vm1742 = vcmp.lt.s32.totalorder %v1545, %v1546
      %v1743 = vsel %vm1742, %v1545, %v1546
      %vm1744 = vcmp.lt.s32.totalorder %v1743, %v1547
      %v1745 = vsel %vm1744, %v1743, %v1547
      %vm1746 = vcmp.lt.s32.totalorder %v1745, %v1548
      %v1747 = vsel %vm1746, %v1745, %v1548
      %vm1748 = vcmp.lt.s32.totalorder %v1747, %v1549
      %v1749 = vsel %vm1748, %v1747, %v1549
      %vm1750 = vcmp.lt.s32.totalorder %v1749, %v1550
      %v1751 = vsel %vm1750, %v1749, %v1550
      %vm1752 = vcmp.lt.s32.totalorder %v1751, %v1551
      %v1753 = vsel %vm1752, %v1751, %v1551
      %vm1754 = vcmp.lt.s32.totalorder %v1753, %v1552
      %v1755 = vsel %vm1754, %v1753, %v1552
      %vm1756 = vcmp.lt.s32.totalorder %v1755, %v1553
      %v1757 = vsel %vm1756, %v1755, %v1553
      %vm1758 = vcmp.lt.s32.totalorder %v1757, %v1554
      %v1759 = vsel %vm1758, %v1757, %v1554
      %vm1760 = vcmp.lt.s32.totalorder %v1759, %v1555
      %v1761 = vsel %vm1760, %v1759, %v1555
      %vm1762 = vcmp.lt.s32.totalorder %v1761, %v1556
      %v1763 = vsel %vm1762, %v1761, %v1556
      %vm1764 = vcmp.lt.s32.totalorder %v1763, %v1557
      %v1765 = vsel %vm1764, %v1763, %v1557
      %vm1766 = vcmp.lt.s32.totalorder %v1765, %v1558
      %v1767 = vsel %vm1766, %v1765, %v1558
      %vm1768 = vcmp.lt.s32.totalorder %v1767, %v1559
      %v1769 = vsel %vm1768, %v1767, %v1559
      %vm1770 = vcmp.lt.s32.totalorder %v1769, %v1560
      %v1771 = vsel %vm1770, %v1769, %v1560
      %v1772 = vrot.slane %v1771, 4
      %vm1773 = vcmp.lt.s32.totalorder %v1771, %v1772
      %v1774 = vsel %vm1773, %v1771, %v1772
      %v1775 = vrot.slane %v1774, 2
      %vm1776 = vcmp.lt.s32.totalorder %v1774, %v1775
      %v1777 = vsel %vm1776, %v1774, %v1775
      %v1778 = vrot.slane %v1777, 1
      %vm1779 = vcmp.lt.s32.totalorder %v1777, %v1778
      %v1780 = vsel %vm1779, %v1777, %v1778
      %vm1781 = vcmp.lt.s32.totalorder %v1561, %v1562
      %v1782 = vsel %vm1781, %v1561, %v1562
      %vm1783 = vcmp.lt.s32.totalorder %v1782, %v1563
      %v1784 = vsel %vm1783, %v1782, %v1563
      %vm1785 = vcmp.lt.s32.totalorder %v1784, %v1564
      %v1786 = vsel %vm1785, %v1784, %v1564
      %vm1787 = vcmp.lt.s32.totalorder %v1786, %v1565
      %v1788 = vsel %vm1787, %v1786, %v1565
      %vm1789 = vcmp.lt.s32.totalorder %v1788, %v1566
      %v1790 = vsel %vm1789, %v1788, %v1566
      %vm1791 = vcmp.lt.s32.totalorder %v1790, %v1567
      %v1792 = vsel %vm1791, %v1790, %v1567
      %vm1793 = vcmp.lt.s32.totalorder %v1792, %v1568
      %v1794 = vsel %vm1793, %v1792, %v1568
      %vm1795 = vcmp.lt.s32.totalorder %v1794, %v1569
      %v1796 = vsel %vm1795, %v1794, %v1569
      %vm1797 = vcmp.lt.s32.totalorder %v1796, %v1570
      %v1798 = vsel %vm1797, %v1796, %v1570
      %vm1799 = vcmp.lt.s32.totalorder %v1798, %v1571
      %v1800 = vsel %vm1799, %v1798, %v1571
      %vm1801 = vcmp.lt.s32.totalorder %v1800, %v1572
      %v1802 = vsel %vm1801, %v1800, %v1572
      %vm1803 = vcmp.lt.s32.totalorder %v1802, %v1573
      %v1804 = vsel %vm1803, %v1802, %v1573
      %vm1805 = vcmp.lt.s32.totalorder %v1804, %v1574
      %v1806 = vsel %vm1805, %v1804, %v1574
      %vm1807 = vcmp.lt.s32.totalorder %v1806, %v1575
      %v1808 = vsel %vm1807, %v1806, %v1575
      %vm1809 = vcmp.lt.s32.totalorder %v1808, %v1576
      %v1810 = vsel %vm1809, %v1808, %v1576
      %v1811 = vrot.slane %v1810, 4
      %vm1812 = vcmp.lt.s32.totalorder %v1810, %v1811
      %v1813 = vsel %vm1812, %v1810, %v1811
      %v1814 = vrot.slane %v1813, 2
      %vm1815 = vcmp.lt.s32.totalorder %v1813, %v1814
      %v1816 = vsel %vm1815, %v1813, %v1814
      %v1817 = vrot.slane %v1816, 1
      %vm1818 = vcmp.lt.s32.totalorder %v1816, %v1817
      %v1819 = vsel %vm1818, %v1816, %v1817
      %vm1820 = vcmp.lt.s32.totalorder %v1577, %v1578
      %v1821 = vsel %vm1820, %v1577, %v1578
      %vm1822 = vcmp.lt.s32.totalorder %v1821, %v1579
      %v1823 = vsel %vm1822, %v1821, %v1579
      %vm1824 = vcmp.lt.s32.totalorder %v1823, %v1580
      %v1825 = vsel %vm1824, %v1823, %v1580
      %vm1826 = vcmp.lt.s32.totalorder %v1825, %v1581
      %v1827 = vsel %vm1826, %v1825, %v1581
      %vm1828 = vcmp.lt.s32.totalorder %v1827, %v1582
      %v1829 = vsel %vm1828, %v1827, %v1582
      %vm1830 = vcmp.lt.s32.totalorder %v1829, %v1583
      %v1831 = vsel %vm1830, %v1829, %v1583
      %vm1832 = vcmp.lt.s32.totalorder %v1831, %v1584
      %v1833 = vsel %vm1832, %v1831, %v1584
      %vm1834 = vcmp.lt.s32.totalorder %v1833, %v1585
      %v1835 = vsel %vm1834, %v1833, %v1585
      %vm1836 = vcmp.lt.s32.totalorder %v1835, %v1586
      %v1837 = vsel %vm1836, %v1835, %v1586
      %vm1838 = vcmp.lt.s32.totalorder %v1837, %v1587
      %v1839 = vsel %vm1838, %v1837, %v1587
      %vm1840 = vcmp.lt.s32.totalorder %v1839, %v1588
      %v1841 = vsel %vm1840, %v1839, %v1588
      %vm1842 = vcmp.lt.s32.totalorder %v1841, %v1589
      %v1843 = vsel %vm1842, %v1841, %v1589
      %vm1844 = vcmp.lt.s32.totalorder %v1843, %v1590
      %v1845 = vsel %vm1844, %v1843, %v1590
      %vm1846 = vcmp.lt.s32.totalorder %v1845, %v1591
      %v1847 = vsel %vm1846, %v1845, %v1591
      %vm1848 = vcmp.lt.s32.totalorder %v1847, %v1592
      %v1849 = vsel %vm1848, %v1847, %v1592
      %v1850 = vrot.slane %v1849, 4
      %vm1851 = vcmp.lt.s32.totalorder %v1849, %v1850
      %v1852 = vsel %vm1851, %v1849, %v1850
      %v1853 = vrot.slane %v1852, 2
      %vm1854 = vcmp.lt.s32.totalorder %v1852, %v1853
      %v1855 = vsel %vm1854, %v1852, %v1853
      %v1856 = vrot.slane %v1855, 1
      %vm1857 = vcmp.lt.s32.totalorder %v1855, %v1856
      %v1858 = vsel %vm1857, %v1855, %v1856
      %vm1859 = vcmp.lt.s32.totalorder %v1593, %v1594
      %v1860 = vsel %vm1859, %v1593, %v1594
      %vm1861 = vcmp.lt.s32.totalorder %v1860, %v1595
      %v1862 = vsel %vm1861, %v1860, %v1595
      %vm1863 = vcmp.lt.s32.totalorder %v1862, %v1596
      %v1864 = vsel %vm1863, %v1862, %v1596
      %vm1865 = vcmp.lt.s32.totalorder %v1864, %v1597
      %v1866 = vsel %vm1865, %v1864, %v1597
      %vm1867 = vcmp.lt.s32.totalorder %v1866, %v1598
      %v1868 = vsel %vm1867, %v1866, %v1598
      %vm1869 = vcmp.lt.s32.totalorder %v1868, %v1599
      %v1870 = vsel %vm1869, %v1868, %v1599
      %vm1871 = vcmp.lt.s32.totalorder %v1870, %v1600
      %v1872 = vsel %vm1871, %v1870, %v1600
      %vm1873 = vcmp.lt.s32.totalorder %v1872, %v1601
      %v1874 = vsel %vm1873, %v1872, %v1601
      %vm1875 = vcmp.lt.s32.totalorder %v1874, %v1602
      %v1876 = vsel %vm1875, %v1874, %v1602
      %vm1877 = vcmp.lt.s32.totalorder %v1876, %v1603
      %v1878 = vsel %vm1877, %v1876, %v1603
      %vm1879 = vcmp.lt.s32.totalorder %v1878, %v1604
      %v1880 = vsel %vm1879, %v1878, %v1604
      %vm1881 = vcmp.lt.s32.totalorder %v1880, %v1605
      %v1882 = vsel %vm1881, %v1880, %v1605
      %vm1883 = vcmp.lt.s32.totalorder %v1882, %v1606
      %v1884 = vsel %vm1883, %v1882, %v1606
      %vm1885 = vcmp.lt.s32.totalorder %v1884, %v1607
      %v1886 = vsel %vm1885, %v1884, %v1607
      %vm1887 = vcmp.lt.s32.totalorder %v1886, %v1608
      %v1888 = vsel %vm1887, %v1886, %v1608
      %v1889 = vrot.slane %v1888, 4
      %vm1890 = vcmp.lt.s32.totalorder %v1888, %v1889
      %v1891 = vsel %vm1890, %v1888, %v1889
      %v1892 = vrot.slane %v1891, 2
      %vm1893 = vcmp.lt.s32.totalorder %v1891, %v1892
      %v1894 = vsel %vm1893, %v1891, %v1892
      %v1895 = vrot.slane %v1894, 1
      %vm1896 = vcmp.lt.s32.totalorder %v1894, %v1895
      %v1897 = vsel %vm1896, %v1894, %v1895
      %vm1898 = vcmp.lt.s32.totalorder %v1609, %v1610
      %v1899 = vsel %vm1898, %v1609, %v1610
      %vm1900 = vcmp.lt.s32.totalorder %v1899, %v1611
      %v1901 = vsel %vm1900, %v1899, %v1611
      %vm1902 = vcmp.lt.s32.totalorder %v1901, %v1612
      %v1903 = vsel %vm1902, %v1901, %v1612
      %vm1904 = vcmp.lt.s32.totalorder %v1903, %v1613
      %v1905 = vsel %vm1904, %v1903, %v1613
      %vm1906 = vcmp.lt.s32.totalorder %v1905, %v1614
      %v1907 = vsel %vm1906, %v1905, %v1614
      %vm1908 = vcmp.lt.s32.totalorder %v1907, %v1615
      %v1909 = vsel %vm1908, %v1907, %v1615
      %vm1910 = vcmp.lt.s32.totalorder %v1909, %v1616
      %v1911 = vsel %vm1910, %v1909, %v1616
      %vm1912 = vcmp.lt.s32.totalorder %v1911, %v1617
      %v1913 = vsel %vm1912, %v1911, %v1617
      %vm1914 = vcmp.lt.s32.totalorder %v1913, %v1618
      %v1915 = vsel %vm1914, %v1913, %v1618
      %vm1916 = vcmp.lt.s32.totalorder %v1915, %v1619
      %v1917 = vsel %vm1916, %v1915, %v1619
      %vm1918 = vcmp.lt.s32.totalorder %v1917, %v1620
      %v1919 = vsel %vm1918, %v1917, %v1620
      %vm1920 = vcmp.lt.s32.totalorder %v1919, %v1621
      %v1921 = vsel %vm1920, %v1919, %v1621
      %vm1922 = vcmp.lt.s32.totalorder %v1921, %v1622
      %v1923 = vsel %vm1922, %v1921, %v1622
      %vm1924 = vcmp.lt.s32.totalorder %v1923, %v1623
      %v1925 = vsel %vm1924, %v1923, %v1623
      %vm1926 = vcmp.lt.s32.totalorder %v1925, %v1624
      %v1927 = vsel %vm1926, %v1925, %v1624
      %v1928 = vrot.slane %v1927, 4
      %vm1929 = vcmp.lt.s32.totalorder %v1927, %v1928
      %v1930 = vsel %vm1929, %v1927, %v1928
      %v1931 = vrot.slane %v1930, 2
      %vm1932 = vcmp.lt.s32.totalorder %v1930, %v1931
      %v1933 = vsel %vm1932, %v1930, %v1931
      %v1934 = vrot.slane %v1933, 1
      %vm1935 = vcmp.lt.s32.totalorder %v1933, %v1934
      %v1936 = vsel %vm1935, %v1933, %v1934
      %v1937 = vsel %vm431, 1, 0
      %1938 = vset.pattern.permute.xlu0 0
      %1939 = vperm.xlu0 %1938, %v1937
      %v1940 = vpop.permute.xlu0 %1939
      %vm1941 = vcmp.eq.s32.totalorder %v1940, 1
      %vm1942 = vcmask 1041409
      %v1943 = vsel %vm1942, %v1702, %v1663
      %vm1944 = vcmask 1042434
      %v1945 = vsel %vm1944, %v1741, %v1943
      %vm1946 = vcmask 1043459
      %v1947 = vsel %vm1946, %v1780, %v1945
      %vm1948 = vcmask 1044484
      %v1949 = vsel %vm1948, %v1819, %v1947
      %vm1950 = vcmask 1045509
      %v1951 = vsel %vm1950, %v1858, %v1949
      %vm1952 = vcmask 1046534
      %v1953 = vsel %vm1952, %v1897, %v1951
      %vm1954 = vcmask 1047559
      %v1955 = vsel %vm1954, %v1936, %v1953
      %v1956 = vsel %vm1941, %v1955, %v278
      %s1957 = scalar_lea.vmem [#allocation3], %s427
      %1958 = vst [vmem:[%s1957] sm:$0xff] %v1956
      %v1959 = vsel %vm1941, %v512, %v425
      %v1968 = vrot.slane %v1362, 7
      %v1969 = vsel %vm1942, %v1968, %v1361
      %v1970 = vrot.slane %v1363, 6
      %v1971 = vsel %vm1944, %v1970, %v1969
      %v1972 = vrot.slane %v1364, 5
      %v1973 = vsel %vm1946, %v1972, %v1971
      %v1974 = vrot.slane %v1365, 4
      %v1975 = vsel %vm1948, %v1974, %v1973
      %v1976 = vrot.slane %v1366, 3
      %v1977 = vsel %vm1950, %v1976, %v1975
      %v1978 = vrot.slane %v1367, 2
      %v1979 = vsel %vm1952, %v1978, %v1977
      %v1980 = vrot.slane %v1368, 1
      %v1981 = vsel %vm1954, %v1980, %v1979
      %v1983 = vsel %vm1941, %v1981, %v426
    $region38: #{tpu_custom_call.1} parent=1 // loop_footer
      %s422 = sadd.s32 %s420, 1
    $region39: #{tpu_custom_call.1} parent=1 // loop_footer_branch
      %419 = sbr.rel target = $region35
    $region40: #{tpu_custom_call.1} parent=1 // loop_exit
      _
    %v1985 = vlaneseq
    %v1986 = vshrl.u32 %v1985, 7
    %v1987 = vsub.s32 0, %v1986
    %v1988 = vrot.slane %v190, %v1987
    %v1990 = vadd.f32 %v425, %v1988
    %1991 = vmax.xlane.f32.xlu0 %v1990
    %v1992 = vpop.xlane.xlu0 %1991
    %v1993 = vsub.f32 %v1990, %v1992
    %v1994 = vmul.f32 %v1993, 1.442695
    %v1995 = vpow.pop %v1994
    %1996 = vadd.xlane.f32.xlu0 %v1995
    %v1997 = vpop.xlane.xlu0 %1996
    %v1998 = vlog2.pop %v1997
    %v1999 = vmul.f32 %v1998, 0.6931472
    %v2000 = vadd.f32 %v1992, %v1999
    %v2001 = vadd.f32 %v426, %v1988
    %2002 = vmax.xlane.f32.xlu0 %v2001
    %v2003 = vpop.xlane.xlu0 %2002
    %vm2004 = vcmp.ge.f32.partialorder %v2001, %v2003
    %v2005 = vsel %vm2004, %v278, 128
    %v2006 = vand.u32 %v2005, 65535
    %v2007 = vshra.s32 %v2005, 16
    %v2008 = vcvt.s32.f32 %v2006
    %v2009 = vcvt.s32.f32 %v2007
    %2010 = vmin.xlane.f32.xlu0 %v2009
    %v2011 = vpop.xlane.xlu0 %2010
    %vm2012 = vcmp.eq.f32.partialorder %v2009, %v2011
    %v2013 = vsel %vm2012, %v2008, inf
    %2014 = vmin.xlane.f32.xlu0 %v2013
    %v2015 = vpop.xlane.xlu0 %2014
    %v2016 = vcvt.f32.s32 %v2015
    %v2017 = vcvt.f32.s32 %v2011
    %v2018 = vshll.u32 %v2017, 16
    %v2019 = vadd.s32 %v2018, %v2016
    %vm2020 = vcmp.eq.s32.totalorder %v278, 0
    %vm2021 = vcmp.eq.s32.totalorder %v278, 1
    %vm2022 = vcmp.eq.s32.totalorder %v278, 2
    %v2023 = vsel %vm2022, %v2003, 0.0
    %v2024 = vsel %vm2021, %v405, %v2023
    %v2025 = vsel %vm2020, %v2000, %v2024
    %2026 = vst [vmem:[#allocation9] sm:$0xff] %v2025
    %vm2027 = vcmp.eq.s32.totalorder %v278, 7
    %v2028 = vsel %vm2027, %v2019, 0
    loop: start=0, step=1, limit=7
    $region41: #{tpu_custom_call.1} parent=1 // loop_pre_header
      _
    $region42: #{tpu_custom_call.1} parent=1 // loop_header
      %s2030 = sphi 0, %s2034
      %p2031 = scmp.ge.s32.totalorder %s2030, 7
      %v2035 = vphi %v2019, %v2054
      %v2036 = vphi %v2028, %v2058
    $region43: #{tpu_custom_call.1} parent=1 // loop_header_branch
      %2033 = sbr.rel (%p2031) target = $region47
    $region44: #{tpu_custom_call.1} parent=1 // loop_body
      %s2037 = ssub.s32 7, %s2030
      %s2038 = smul.u32 %s2037, 8
      %s2039 = scalar_lea.vmem [#allocation3], %s2038
      %v2040 = vld [vmem:[%s2039] sm:$0xff]
      %vm2041 = vcmp.eq.s32.totalorder %v278, %v2035
      %v2042 = vsel %vm2041, %v2040, 0
      %v2043 = vand.u32 %v2042, 65535
      %v2044 = vshrl.u32 %v2042, 16
      %v2045 = vcvt.s32.f32 %v2043
      %v2046 = vcvt.s32.f32 %v2044
      %2047 = vadd.xlane.f32.xlu0 %v2045
      %v2048 = vpop.xlane.xlu0 %2047
      %2049 = vadd.xlane.f32.xlu0 %v2046
      %v2050 = vpop.xlane.xlu0 %2049
      %v2051 = vcvt.f32.s32 %v2048
      %v2052 = vcvt.f32.s32 %v2050
      %v2053 = vshll.u32 %v2052, 16
      %v2054 = vadd.s32 %v2053, %v2051
      %s2055 = ssub.s32 6, %s2030
      %v2056 = vstv %s2055
      %vm2057 = vcmp.eq.s32.totalorder %v278, %v2056
      %v2058 = vsel %vm2057, %v2054, %v2036
    $region45: #{tpu_custom_call.1} parent=1 // loop_footer
      %s2034 = sadd.s32 1, %s2030
    $region46: #{tpu_custom_call.1} parent=1 // loop_footer_branch
      %2029 = sbr.rel target = $region42
    $region47: #{tpu_custom_call.1} parent=1 // loop_exit
      _
    %2059 = vst [vmem:[#allocation10] sm:$0xff] %v2036
    // Predicated region
    $region48: #{tpu_custom_call.1} parent=1 // pred_check
      _
    $region49: #{tpu_custom_call.1} parent=1 // pred_check_branch
      %2061 = sbr.rel (0) target = $region51
    $region50: #{tpu_custom_call.1} parent=1 // pred_region
      %s2063 = ssub.s32 128, 128
      %2064 = vsyncadd [#allocation8], %s2063
      %s2066 = sshll.u32 [#allocation9], 4
      %s2067 = int_to_ptr.vmem [resolvable:$true] %s2066
      %2069 = dma.vmem_to_hbm [thread:$0]  %s2067, 128, %s8, [#allocation8]
    $region51: #{tpu_custom_call.1} parent=1 // pred_fallthru
      _
    // Predicated region
    $region52: #{tpu_custom_call.1} parent=1 // pred_check
      _
    $region53: #{tpu_custom_call.1} parent=1 // pred_check_branch
      %2071 = sbr.rel (0) target = $region55
    $region54: #{tpu_custom_call.1} parent=1 // pred_region
      %s2073 = ssub.s32 128, 128
      %2074 = vsyncadd [#allocation11], %s2073
      %s2076 = sshll.u32 [#allocation10], 4
      %s2077 = int_to_ptr.vmem [resolvable:$true] %s2076
      %2079 = dma.vmem_to_hbm [thread:$0]  %s2077, 128, %s9, [#allocation11]
    $region55: #{tpu_custom_call.1} parent=1 // pred_fallthru
      _
    // Predicated region
    $region56: #{tpu_custom_call.1} parent=1 // pred_check
      _
    $region57: #{tpu_custom_call.1} parent=1 // pred_check_branch
      %2081 = sbr.rel (0) target = $region59
    $region58: #{tpu_custom_call.1} parent=1 // pred_region
      %2082 = dma.done [#allocation8], 128
    $region59: #{tpu_custom_call.1} parent=1 // pred_fallthru
      _
    // Predicated region
    $region60: #{tpu_custom_call.1} parent=1 // pred_check
      _
    $region61: #{tpu_custom_call.1} parent=1 // pred_check_branch
      %2084 = sbr.rel (0) target = $region63
    $region62: #{tpu_custom_call.1} parent=1 // pred_region
      %2085 = dma.done [#allocation11], 128
    $region63: #{tpu_custom_call.1} parent=1 // pred_fallthru
      _
    %2086 = vsyncpa [#allocation7], 1
    %2087 = vsyncpa [#allocation8], 1
    %2088 = vsyncpa [#allocation11], 1

</llo_original>
